<compile_context>
chip_gen: v6e
topology: v6e:2x2x1
jax: 0.10.0
libtpu: 0.0.40
codegen_flags: <defaults>
</compile_context>

<pallas_src>
import functools

import jax
import jax.numpy as jnp
from jax.experimental import pallas as pl
from jax.experimental.pallas import tpu as pltpu


def _round_up(v, m):
    return ((v + m - 1) // m) * m


def _mlp_kernel(*refs, num_hidden, use_dropout, neg_slope):
    # refs layout:
    #   x_ref,
    #   for each hidden layer: w_ref, b_ref[, mask_ref],
    #   w_last_t_ref (out_dim, prev_dim), b_last_ref (out_dim, 1),
    #   o_ref (out_dim, tile_n)
    o_ref = refs[-1]
    h = refs[0][...].astype(jnp.float32)

    per = 3 if use_dropout else 2
    idx = 1
    for _ in range(num_hidden):
        w = refs[idx][...]          # (d_in, d_out)
        b = refs[idx + 1][...]      # (1, d_out)
        h = jnp.dot(h, w, preferred_element_type=jnp.float32) + b
        # LeakyReLU, negative_slope = 0.1
        h = jnp.where(h > 0, h, neg_slope * h)
        if use_dropout:
            # precomputed inverted-dropout mask: 0 or 1/(1-p)
            h = h * refs[idx + 2][...]
        idx += per

    wl_t = refs[idx][...]           # (out_dim, prev_dim)
    bl = refs[idx + 1][...]         # (out_dim, 1)
    # (out_dim, prev_dim) x (tile_n, prev_dim)^T -> (out_dim, tile_n)  (lane-dense output)
    logits_t = jax.lax.dot_general(
        wl_t, h, (((1,), (1,)), ((), ())), preferred_element_type=jnp.float32)
    o_ref[...] = (logits_t + bl).astype(o_ref.dtype)


def predictor_forward(x, params, *, dropout_p=0.2, key=None, training=True, tile_n=256):
    """Forward pass of Predictor. params = (list_of_W [in,out], list_of_b [out])."""
    ws, bs = params
    num_layers = len(ws)
    num_hidden = num_layers - 1
    out_dim = ws[-1].shape[1]

    x = x.astype(jnp.float32)
    n, in_dim = x.shape

    # Tile selection: large row tiles (multiple of 8), padded batch so every tile is full.
    tile = min(int(tile_n), _round_up(max(n, 1), 8))
    tile = max(8, tile - (tile % 8))
    n_pad = _round_up(n, tile)
    if n_pad != n:
        x = jnp.pad(x, ((0, n_pad - n), (0, 0)))
    grid = (n_pad // tile,)

    use_dropout = bool(training) and float(dropout_p) > 0.0 and num_hidden > 0
    masks = []
    if use_dropout:
        assert key is not None, "need a PRNG key for dropout in training mode"
        scale = 1.0 / (1.0 - float(dropout_p))
        subkeys = jax.random.split(key, num_hidden)
        for l in range(num_hidden):
            d_out = ws[l].shape[1]
            keep = jax.random.bernoulli(subkeys[l], 1.0 - float(dropout_p), (n_pad, d_out))
            masks.append(keep.astype(jnp.float32) * scale)

    # Build inputs + BlockSpecs.
    in_specs = [pl.BlockSpec((tile, in_dim), lambda i: (i, 0))]
    inputs = [x]
    for l in range(num_hidden):
        d_in, d_out = ws[l].shape
        in_specs.append(pl.BlockSpec((d_in, d_out), lambda i: (0, 0)))
        inputs.append(ws[l].astype(jnp.float32))
        in_specs.append(pl.BlockSpec((1, d_out), lambda i: (0, 0)))
        inputs.append(bs[l].astype(jnp.float32).reshape(1, d_out))
        if use_dropout:
            in_specs.append(pl.BlockSpec((tile, d_out), lambda i: (i, 0)))
            inputs.append(masks[l])
    d_in_last, _ = ws[-1].shape
    in_specs.append(pl.BlockSpec((out_dim, d_in_last), lambda i: (0, 0)))
    inputs.append(jnp.transpose(ws[-1]).astype(jnp.float32))          # (out_dim, prev_dim)
    in_specs.append(pl.BlockSpec((out_dim, 1), lambda i: (0, 0)))
    inputs.append(bs[-1].astype(jnp.float32).reshape(out_dim, 1))

    kernel = functools.partial(
        _mlp_kernel, num_hidden=num_hidden, use_dropout=use_dropout, neg_slope=0.1)

    out_t = pl.pallas_call(
        kernel,
        out_shape=jax.ShapeDtypeStruct((out_dim, n_pad), jnp.float32),
        grid=grid,
        in_specs=in_specs,
        out_specs=pl.BlockSpec((out_dim, tile), lambda i: (0, i)),
        compiler_params=pltpu.CompilerParams(dimension_semantics=("parallel",)),
    )(*inputs)

    # (out_dim, n_pad) -> (n, out_dim)
    return jnp.transpose(out_t)[:n]


def init_params(key, hidden_dims, out_dim=2):
    """nn.Linear-style init: U(-1/sqrt(fan_in), 1/sqrt(fan_in)); W stored as [in, out]."""
    dims = list(hidden_dims) + [out_dim]
    ws, bs = [], []
    keys = jax.random.split(key, 2 * (len(dims) - 1))
    for l in range(len(dims) - 1):
        fan_in, fan_out = dims[l], dims[l + 1]
        lim = 1.0 / (fan_in ** 0.5)
        ws.append(jax.random.uniform(keys[2 * l], (fan_in, fan_out), jnp.float32, -lim, lim))
        bs.append(jax.random.uniform(keys[2 * l + 1], (fan_out,), jnp.float32, -lim, lim))
    return ws, bs


if __name__ == "__main__":
    # Predictor(hidden_dims=[32, 64, 32], dropout=0.2):
    #   Linear(32,64) -> LeakyReLU(0.1) -> Dropout -> Linear(64,32) -> LeakyReLU(0.1)
    #   -> Dropout -> Linear(32, 2)
    HIDDEN_DIMS = [32, 64, 32]
    OUT_DIM = 2
    DROPOUT = 0.2
    N = 512  # two 256-row tiles

    key = jax.random.PRNGKey(0)
    kx, kp, kd = jax.random.split(key, 3)
    x = jax.random.normal(kx, (N, HIDDEN_DIMS[0]), jnp.float32)
    params = init_params(kp, HIDDEN_DIMS, out_dim=OUT_DIM)

    out = predictor_forward(x, params, dropout_p=DROPOUT, key=kd, training=True, tile_n=256)
    out = jax.block_until_ready(out)
    assert out.shape == (N, OUT_DIM) and out.dtype == jnp.float32
    assert bool(jnp.all(jnp.isfinite(out)))
    print("KERNEL_OK")
</pallas_src>

<mosaic_0001>
module attributes {stable_mosaic.version = 11 : i64} {
  func.func @_mlp_kernel(%arg0: i32, %arg1: memref<256x32xf32, #tpu.memory_space<vmem>>, %arg2: memref<32x64xf32, #tpu.memory_space<vmem>>, %arg3: memref<1x64xf32, #tpu.memory_space<vmem>>, %arg4: memref<256x64xf32, #tpu.memory_space<vmem>>, %arg5: memref<64x32xf32, #tpu.memory_space<vmem>>, %arg6: memref<1x32xf32, #tpu.memory_space<vmem>>, %arg7: memref<256x32xf32, #tpu.memory_space<vmem>>, %arg8: memref<2x32xf32, #tpu.memory_space<vmem>>, %arg9: memref<2x1xf32, #tpu.memory_space<vmem>>, %arg10: memref<2x256xf32, #tpu.memory_space<vmem>>) attributes {dimension_semantics = [#tpu.dimension_semantics<parallel>], iteration_bounds = array<i64: 2>, scalar_prefetch = 0 : i64, scratch_operands = 0 : i64, tpu.core_type = #tpu.core_type<tc>, window_params = [{transform_indices = @transform_0, window_bounds = array<i64: 256, 32>}, {pipeline_mode = #tpu.pipeline_mode<synchronous>, transform_indices = @transform_1, window_bounds = array<i64: 32, 64>}, {pipeline_mode = #tpu.pipeline_mode<synchronous>, transform_indices = @transform_2, window_bounds = array<i64: 1, 64>}, {transform_indices = @transform_3, window_bounds = array<i64: 256, 64>}, {pipeline_mode = #tpu.pipeline_mode<synchronous>, transform_indices = @transform_4, window_bounds = array<i64: 64, 32>}, {pipeline_mode = #tpu.pipeline_mode<synchronous>, transform_indices = @transform_5, window_bounds = array<i64: 1, 32>}, {transform_indices = @transform_6, window_bounds = array<i64: 256, 32>}, {pipeline_mode = #tpu.pipeline_mode<synchronous>, transform_indices = @transform_7, window_bounds = array<i64: 2, 32>}, {pipeline_mode = #tpu.pipeline_mode<synchronous>, transform_indices = @transform_8, window_bounds = array<i64: 2, 1>}, {transform_indices = @transform_9, window_bounds = array<i64: 2, 256>}]} {
    %c0 = arith.constant 0 : index
    %c0_0 = arith.constant 0 : index
    %0 = vector.load %arg1[%c0, %c0_0] : memref<256x32xf32, #tpu.memory_space<vmem>>, vector<256x32xf32>
    %c0_1 = arith.constant 0 : index
    %c0_2 = arith.constant 0 : index
    %1 = vector.load %arg2[%c0_1, %c0_2] : memref<32x64xf32, #tpu.memory_space<vmem>>, vector<32x64xf32>
    %c0_3 = arith.constant 0 : index
    %c0_4 = arith.constant 0 : index
    %2 = vector.load %arg3[%c0_3, %c0_4] : memref<1x64xf32, #tpu.memory_space<vmem>>, vector<1x64xf32>
    %cst = arith.constant dense<0.000000e+00> : vector<256x64xf32>
    %3 = tpu.matmul %0, %1, %cst {dimension_numbers = #tpu.dot_dimension_numbers<[1], [0], [0], [1], [0, 0, 1, 1], [], []>} : vector<256x32xf32>, vector<32x64xf32>, vector<256x64xf32> -> vector<256x64xf32>
    %4 = vector.broadcast %2 : vector<1x64xf32> to vector<256x64xf32>
    %5 = arith.addf %3, %4 : vector<256x64xf32>
    %cst_5 = arith.constant 0.000000e+00 : f32
    %6 = vector.broadcast %cst_5 : f32 to vector<256x64xf32>
    %7 = arith.cmpf ogt, %5, %6 : vector<256x64xf32>
    %cst_6 = arith.constant 1.000000e-01 : f32
    %8 = vector.broadcast %cst_6 : f32 to vector<256x64xf32>
    %9 = arith.mulf %8, %5 : vector<256x64xf32>
    %10 = arith.select %7, %5, %9 : vector<256x64xi1>, vector<256x64xf32>
    %c0_7 = arith.constant 0 : index
    %c0_8 = arith.constant 0 : index
    %11 = vector.load %arg4[%c0_7, %c0_8] : memref<256x64xf32, #tpu.memory_space<vmem>>, vector<256x64xf32>
    %12 = arith.mulf %10, %11 : vector<256x64xf32>
    %c0_9 = arith.constant 0 : index
    %c0_10 = arith.constant 0 : index
    %13 = vector.load %arg5[%c0_9, %c0_10] : memref<64x32xf32, #tpu.memory_space<vmem>>, vector<64x32xf32>
    %c0_11 = arith.constant 0 : index
    %c0_12 = arith.constant 0 : index
    %14 = vector.load %arg6[%c0_11, %c0_12] : memref<1x32xf32, #tpu.memory_space<vmem>>, vector<1x32xf32>
    %cst_13 = arith.constant dense<0.000000e+00> : vector<256x32xf32>
    %15 = tpu.matmul %12, %13, %cst_13 {dimension_numbers = #tpu.dot_dimension_numbers<[1], [0], [0], [1], [0, 0, 1, 1], [], []>} : vector<256x64xf32>, vector<64x32xf32>, vector<256x32xf32> -> vector<256x32xf32>
    %16 = vector.broadcast %14 : vector<1x32xf32> to vector<256x32xf32>
    %17 = arith.addf %15, %16 : vector<256x32xf32>
    %cst_14 = arith.constant 0.000000e+00 : f32
    %18 = vector.broadcast %cst_14 : f32 to vector<256x32xf32>
    %19 = arith.cmpf ogt, %17, %18 : vector<256x32xf32>
    %cst_15 = arith.constant 1.000000e-01 : f32
    %20 = vector.broadcast %cst_15 : f32 to vector<256x32xf32>
    %21 = arith.mulf %20, %17 : vector<256x32xf32>
    %22 = arith.select %19, %17, %21 : vector<256x32xi1>, vector<256x32xf32>
    %c0_16 = arith.constant 0 : index
    %c0_17 = arith.constant 0 : index
    %23 = vector.load %arg7[%c0_16, %c0_17] : memref<256x32xf32, #tpu.memory_space<vmem>>, vector<256x32xf32>
    %24 = arith.mulf %22, %23 : vector<256x32xf32>
    %c0_18 = arith.constant 0 : index
    %c0_19 = arith.constant 0 : index
    %25 = vector.load %arg8[%c0_18, %c0_19] : memref<2x32xf32, #tpu.memory_space<vmem>>, vector<2x32xf32>
    %c0_20 = arith.constant 0 : index
    %c0_21 = arith.constant 0 : index
    %26 = vector.load %arg9[%c0_20, %c0_21] : memref<2x1xf32, #tpu.memory_space<vmem>>, vector<2x1xf32>
    %cst_22 = arith.constant dense<0.000000e+00> : vector<2x256xf32>
    %27 = tpu.matmul %25, %24, %cst_22 {dimension_numbers = #tpu.dot_dimension_numbers<[1], [1], [0], [0], [0, 0, 1, 0], [], []>} : vector<2x32xf32>, vector<256x32xf32>, vector<2x256xf32> -> vector<2x256xf32>
    %28 = vector.broadcast %26 : vector<2x1xf32> to vector<2x256xf32>
    %29 = arith.addf %27, %28 : vector<2x256xf32>
    %c0_23 = arith.constant 0 : index
    %c0_24 = arith.constant 0 : index
    %30 = vector.load %arg10[%c0_23, %c0_24] : memref<2x256xf32, #tpu.memory_space<vmem>>, vector<2x256xf32>
    tpu.vector_store %arg10[%c0_23, %c0_24], %29 {strides = array<i32>} : memref<2x256xf32, #tpu.memory_space<vmem>>, vector<2x256xf32>,
    return
  }
  func.func @transform_0(%arg0: i32) -> (i32, i32) {
    %c0_i32 = arith.constant 0 : i32
    %c0_i32_0 = arith.constant 0 : i32
    return %arg0, %c0_i32 : i32, i32
  }
  func.func @transform_1(%arg0: i32) -> (i32, i32) {
    %c0_i32 = arith.constant 0 : i32
    %c0_i32_0 = arith.constant 0 : i32
    %c0_i32_1 = arith.constant 0 : i32
    return %c0_i32, %c0_i32_0 : i32, i32
  }
  func.func @transform_2(%arg0: i32) -> (i32, i32) {
    %c0_i32 = arith.constant 0 : i32
    %c0_i32_0 = arith.constant 0 : i32
    %c0_i32_1 = arith.constant 0 : i32
    return %c0_i32, %c0_i32_0 : i32, i32
  }
  func.func @transform_3(%arg0: i32) -> (i32, i32) {
    %c0_i32 = arith.constant 0 : i32
    %c0_i32_0 = arith.constant 0 : i32
    return %arg0, %c0_i32 : i32, i32
  }
  func.func @transform_4(%arg0: i32) -> (i32, i32) {
    %c0_i32 = arith.constant 0 : i32
    %c0_i32_0 = arith.constant 0 : i32
    %c0_i32_1 = arith.constant 0 : i32
    return %c0_i32, %c0_i32_0 : i32, i32
  }
  func.func @transform_5(%arg0: i32) -> (i32, i32) {
    %c0_i32 = arith.constant 0 : i32
    %c0_i32_0 = arith.constant 0 : i32
    %c0_i32_1 = arith.constant 0 : i32
    return %c0_i32, %c0_i32_0 : i32, i32
  }
  func.func @transform_6(%arg0: i32) -> (i32, i32) {
    %c0_i32 = arith.constant 0 : i32
    %c0_i32_0 = arith.constant 0 : i32
    return %arg0, %c0_i32 : i32, i32
  }
  func.func @transform_7(%arg0: i32) -> (i32, i32) {
    %c0_i32 = arith.constant 0 : i32
    %c0_i32_0 = arith.constant 0 : i32
    %c0_i32_1 = arith.constant 0 : i32
    return %c0_i32, %c0_i32_0 : i32, i32
  }
  func.func @transform_8(%arg0: i32) -> (i32, i32) {
    %c0_i32 = arith.constant 0 : i32
    %c0_i32_0 = arith.constant 0 : i32
    %c0_i32_1 = arith.constant 0 : i32
    return %c0_i32, %c0_i32_0 : i32, i32
  }
  func.func @transform_9(%arg0: i32) -> (i32, i32) {
    %c0_i32 = arith.constant 0 : i32
    %c0_i32_0 = arith.constant 0 : i32
    return %c0_i32, %arg0 : i32, i32
  }
}

</mosaic_0001>

<llo_original>
// kernel: tpu_custom_call.1
$region0: #{tpu_custom_call.1}
  #allocation0 [shape = 'u32[]', space=smem, size = 0x4, offset = 0x4, fixed_abs, tag = 'smem constant byte address 0x4 - core index']
  #allocation1 [shape = 'u32[144,128]{1,0:T(1,128)}', space=vmem, size = 0x12000, scoped, tag = 'internal scratch']
  %s0 = inlined_call_operand.vmem [shape: f32[512,32], index: 0, kind: input, shape index: {}]
  %s1 = inlined_call_operand.vmem [shape: f32[32,64], index: 1, kind: input, shape index: {}]
  %s2 = inlined_call_operand.vmem [shape: f32[1,64], index: 2, kind: input, shape index: {}]
  %s3 = inlined_call_operand.vmem [shape: f32[512,64], index: 3, kind: input, shape index: {}]
  %s4 = inlined_call_operand.vmem [shape: f32[64,32], index: 4, kind: input, shape index: {}]
  %s5 = inlined_call_operand.vmem [shape: f32[1,32], index: 5, kind: input, shape index: {}]
  %s6 = inlined_call_operand.vmem [shape: f32[512,32], index: 6, kind: input, shape index: {}]
  %s7 = inlined_call_operand.vmem [shape: f32[2,32], index: 7, kind: input, shape index: {}]
  %s8 = inlined_call_operand.vmem [shape: f32[2,1], index: 8, kind: input, shape index: {}]
  %s9 = inlined_call_operand.hbm [shape: f32[2,512], index: 9, kind: output, shape index: {}]
  %s10 = sld [smem:[#allocation0]]
  $region69: #{tpu_custom_call.1} parent=0
    _
  %s12 = ssub.s32 1, %s10
  %s13 = scalar_select 0, %s12, %s10
  $region1: #{tpu_custom_call.1} parent=0
    #allocation2 [shape = 'u8[4096]{0}', space=vmem, size = 0x1000, scoped, tag = 'output window, operand 0']
    #allocation3 [shape = 's32[2]{0}', space=sflag, size = 0x8, scoped, tag = 'scoped memory for tpu_custom_call.1']
    %14 = vsyncpa [#allocation3], 0
    %s15 = scalar_lea.sflag [#allocation3], 1
    %16 = vsyncpa %s15, 0
    loop: start=0, step=1, limit=4
    $region2: #{tpu_custom_call.1} parent=1 // loop_pre_header
      _
    $region3: #{tpu_custom_call.1} parent=1 // loop_header
      %s18 = sphi 0, %s22
      %p19 = scmp.ge.s32.totalorder %s18, 4
      %s28 = sphi 0, %s30
      %s31 = sphi 0, %s28
      %s32 = sphi 0, %s31
      %s48 = sphi 0, %s32
      %s52 = sphi 0, %s52
      %s54 = sphi 0, %s52
      %s55 = sphi 0, %s54
      %s69 = sphi 0, %s55
      %s73 = sphi 0, %s73
      %s75 = sphi 0, %s73
      %s76 = sphi 0, %s75
      %s90 = sphi 0, %s76
      %s96 = sphi 0, %s98
      %s99 = sphi 0, %s96
      %s100 = sphi 0, %s99
      %s116 = sphi 0, %s100
      %s120 = sphi 0, %s120
      %s122 = sphi 0, %s120
      %s123 = sphi 0, %s122
      %s137 = sphi 0, %s123
      %s141 = sphi 0, %s141
      %s143 = sphi 0, %s141
      %s144 = sphi 0, %s143
      %s158 = sphi 0, %s144
      %s164 = sphi 0, %s166
      %s167 = sphi 0, %s164
      %s168 = sphi 0, %s167
      %s184 = sphi 0, %s168
      %s188 = sphi 0, %s188
      %s190 = sphi 0, %s188
      %s191 = sphi 0, %s190
      %s205 = sphi 0, %s191
      %s209 = sphi 0, %s209
      %s211 = sphi 0, %s209
      %s212 = sphi 0, %s211
      %s226 = sphi 0, %s212
      %s232 = sphi 0, %s234
      %s235 = sphi 0, %s232
      %s236 = sphi 0, %s235
      %s252 = sphi 0, %s236
    $region4: #{tpu_custom_call.1} parent=1 // loop_header_branch
      %21 = sbr.rel (%p19) target = $region8
    $region5: #{tpu_custom_call.1} parent=1 // loop_body
      %s23 = ssub.s32 %s18, 1
      %s24 = ssub.s32 %s18, 2
      %s25 = sadd.s32 %s18, 1
      %s26 = ssub.s32 %s18, %s25
      %p27 = scmp.eq.s32.totalorder %s26, 0
      %s29 = sadd.s32 %s28, 1
      %s30 = scalar_select %p27, %s28, %s29
      %p33 = pneg %p27
      %p34 = scmp.eq.s32.totalorder %s18, 1
      %p35 = por %p33, %p34
      %p36 = scmp.ne.s32.totalorder %s28, %s31
      %p37 = scmp.eq.s32.totalorder %s18, 0
      %p38 = por %p36, %p37
      %p39 = scmp.ne.s32.totalorder %s28, %s31
      %p40 = scmp.eq.s32.totalorder %s23, 1
      %p41 = por %p39, %p40
      %p42 = scmp.ne.s32.totalorder %s31, %s32
      %p43 = scmp.eq.s32.totalorder %s23, 0
      %p44 = por %p42, %p43
      %p45 = scmp.ne.s32.totalorder %s31, %s32
      %p46 = scmp.eq.s32.totalorder %s24, 1
      %p47 = por %p45, %p46
      %p49 = scmp.ne.s32.totalorder %s32, %s48
      %p50 = scmp.eq.s32.totalorder %s24, 0
      %p51 = por %p49, %p50
      %s53 = sadd.s32 %s52, 1
      %p56 = scmp.eq.s32.totalorder %s18, 1
      %p57 = scmp.ne.s32.totalorder %s52, %s54
      %p58 = scmp.eq.s32.totalorder %s18, 0
      %p59 = por %p57, %p58
      %p60 = scmp.ne.s32.totalorder %s52, %s54
      %p61 = scmp.eq.s32.totalorder %s23, 1
      %p62 = por %p60, %p61
      %p63 = scmp.ne.s32.totalorder %s54, %s55
      %p64 = scmp.eq.s32.totalorder %s23, 0
      %p65 = por %p63, %p64
      %p66 = scmp.ne.s32.totalorder %s54, %s55
      %p67 = scmp.eq.s32.totalorder %s24, 1
      %p68 = por %p66, %p67
      %p70 = scmp.ne.s32.totalorder %s55, %s69
      %p71 = scmp.eq.s32.totalorder %s24, 0
      %p72 = por %p70, %p71
      %s74 = sadd.s32 %s73, 1
      %p77 = scmp.eq.s32.totalorder %s18, 1
      %p78 = scmp.ne.s32.totalorder %s73, %s75
      %p79 = scmp.eq.s32.totalorder %s18, 0
      %p80 = por %p78, %p79
      %p81 = scmp.ne.s32.totalorder %s73, %s75
      %p82 = scmp.eq.s32.totalorder %s23, 1
      %p83 = por %p81, %p82
      %p84 = scmp.ne.s32.totalorder %s75, %s76
      %p85 = scmp.eq.s32.totalorder %s23, 0
      %p86 = por %p84, %p85
      %p87 = scmp.ne.s32.totalorder %s75, %s76
      %p88 = scmp.eq.s32.totalorder %s24, 1
      %p89 = por %p87, %p88
      %p91 = scmp.ne.s32.totalorder %s76, %s90
      %p92 = scmp.eq.s32.totalorder %s24, 0
      %p93 = por %p91, %p92
      %s94 = ssub.s32 %s18, %s25
      %p95 = scmp.eq.s32.totalorder %s94, 0
      %s97 = sadd.s32 %s96, 1
      %s98 = scalar_select %p95, %s96, %s97
      %p101 = pneg %p95
      %p102 = scmp.eq.s32.totalorder %s18, 1
      %p103 = por %p101, %p102
      %p104 = scmp.ne.s32.totalorder %s96, %s99
      %p105 = scmp.eq.s32.totalorder %s18, 0
      %p106 = por %p104, %p105
      %p107 = scmp.ne.s32.totalorder %s96, %s99
      %p108 = scmp.eq.s32.totalorder %s23, 1
      %p109 = por %p107, %p108
      %p110 = scmp.ne.s32.totalorder %s99, %s100
      %p111 = scmp.eq.s32.totalorder %s23, 0
      %p112 = por %p110, %p111
      %p113 = scmp.ne.s32.totalorder %s99, %s100
      %p114 = scmp.eq.s32.totalorder %s24, 1
      %p115 = por %p113, %p114
      %p117 = scmp.ne.s32.totalorder %s100, %s116
      %p118 = scmp.eq.s32.totalorder %s24, 0
      %p119 = por %p117, %p118
      %s121 = sadd.s32 %s120, 1
      %p124 = scmp.eq.s32.totalorder %s18, 1
      %p125 = scmp.ne.s32.totalorder %s120, %s122
      %p126 = scmp.eq.s32.totalorder %s18, 0
      %p127 = por %p125, %p126
      %p128 = scmp.ne.s32.totalorder %s120, %s122
      %p129 = scmp.eq.s32.totalorder %s23, 1
      %p130 = por %p128, %p129
      %p131 = scmp.ne.s32.totalorder %s122, %s123
      %p132 = scmp.eq.s32.totalorder %s23, 0
      %p133 = por %p131, %p132
      %p134 = scmp.ne.s32.totalorder %s122, %s123
      %p135 = scmp.eq.s32.totalorder %s24, 1
      %p136 = por %p134, %p135
      %p138 = scmp.ne.s32.totalorder %s123, %s137
      %p139 = scmp.eq.s32.totalorder %s24, 0
      %p140 = por %p138, %p139
      %s142 = sadd.s32 %s141, 1
      %p145 = scmp.eq.s32.totalorder %s18, 1
      %p146 = scmp.ne.s32.totalorder %s141, %s143
      %p147 = scmp.eq.s32.totalorder %s18, 0
      %p148 = por %p146, %p147
      %p149 = scmp.ne.s32.totalorder %s141, %s143
      %p150 = scmp.eq.s32.totalorder %s23, 1
      %p151 = por %p149, %p150
      %p152 = scmp.ne.s32.totalorder %s143, %s144
      %p153 = scmp.eq.s32.totalorder %s23, 0
      %p154 = por %p152, %p153
      %p155 = scmp.ne.s32.totalorder %s143, %s144
      %p156 = scmp.eq.s32.totalorder %s24, 1
      %p157 = por %p155, %p156
      %p159 = scmp.ne.s32.totalorder %s144, %s158
      %p160 = scmp.eq.s32.totalorder %s24, 0
      %p161 = por %p159, %p160
      %s162 = ssub.s32 %s18, %s25
      %p163 = scmp.eq.s32.totalorder %s162, 0
      %s165 = sadd.s32 %s164, 1
      %s166 = scalar_select %p163, %s164, %s165
      %p169 = pneg %p163
      %p170 = scmp.eq.s32.totalorder %s18, 1
      %p171 = por %p169, %p170
      %p172 = scmp.ne.s32.totalorder %s164, %s167
      %p173 = scmp.eq.s32.totalorder %s18, 0
      %p174 = por %p172, %p173
      %p175 = scmp.ne.s32.totalorder %s164, %s167
      %p176 = scmp.eq.s32.totalorder %s23, 1
      %p177 = por %p175, %p176
      %p178 = scmp.ne.s32.totalorder %s167, %s168
      %p179 = scmp.eq.s32.totalorder %s23, 0
      %p180 = por %p178, %p179
      %p181 = scmp.ne.s32.totalorder %s167, %s168
      %p182 = scmp.eq.s32.totalorder %s24, 1
      %p183 = por %p181, %p182
      %p185 = scmp.ne.s32.totalorder %s168, %s184
      %p186 = scmp.eq.s32.totalorder %s24, 0
      %p187 = por %p185, %p186
      %s189 = sadd.s32 %s188, 1
      %p192 = scmp.eq.s32.totalorder %s18, 1
      %p193 = scmp.ne.s32.totalorder %s188, %s190
      %p194 = scmp.eq.s32.totalorder %s18, 0
      %p195 = por %p193, %p194
      %p196 = scmp.ne.s32.totalorder %s188, %s190
      %p197 = scmp.eq.s32.totalorder %s23, 1
      %p198 = por %p196, %p197
      %p199 = scmp.ne.s32.totalorder %s190, %s191
      %p200 = scmp.eq.s32.totalorder %s23, 0
      %p201 = por %p199, %p200
      %p202 = scmp.ne.s32.totalorder %s190, %s191
      %p203 = scmp.eq.s32.totalorder %s24, 1
      %p204 = por %p202, %p203
      %p206 = scmp.ne.s32.totalorder %s191, %s205
      %p207 = scmp.eq.s32.totalorder %s24, 0
      %p208 = por %p206, %p207
      %s210 = sadd.s32 %s209, 1
      %p213 = scmp.eq.s32.totalorder %s18, 1
      %p214 = scmp.ne.s32.totalorder %s209, %s211
      %p215 = scmp.eq.s32.totalorder %s18, 0
      %p216 = por %p214, %p215
      %p217 = scmp.ne.s32.totalorder %s209, %s211
      %p218 = scmp.eq.s32.totalorder %s23, 1
      %p219 = por %p217, %p218
      %p220 = scmp.ne.s32.totalorder %s211, %s212
      %p221 = scmp.eq.s32.totalorder %s23, 0
      %p222 = por %p220, %p221
      %p223 = scmp.ne.s32.totalorder %s211, %s212
      %p224 = scmp.eq.s32.totalorder %s24, 1
      %p225 = por %p223, %p224
      %p227 = scmp.ne.s32.totalorder %s212, %s226
      %p228 = scmp.eq.s32.totalorder %s24, 0
      %p229 = por %p227, %p228
      %s230 = ssub.s32 %s18, %s25
      %p231 = scmp.eq.s32.totalorder %s230, 0
      %s233 = sadd.s32 %s232, 1
      %s234 = scalar_select %p231, %s232, %s233
      %p237 = pneg %p231
      %p238 = scmp.eq.s32.totalorder %s18, 1
      %p239 = por %p237, %p238
      %p240 = scmp.ne.s32.totalorder %s232, %s235
      %p241 = scmp.eq.s32.totalorder %s18, 0
      %p242 = por %p240, %p241
      %p243 = scmp.ne.s32.totalorder %s232, %s235
      %p244 = scmp.eq.s32.totalorder %s23, 1
      %p245 = por %p243, %p244
      %p246 = scmp.ne.s32.totalorder %s235, %s236
      %p247 = scmp.eq.s32.totalorder %s23, 0
      %p248 = por %p246, %p247
      %p249 = scmp.ne.s32.totalorder %s235, %s236
      %p250 = scmp.eq.s32.totalorder %s24, 1
      %p251 = por %p249, %p250
      %p253 = scmp.ne.s32.totalorder %s236, %s252
      %p254 = scmp.eq.s32.totalorder %s24, 0
      %p255 = por %p253, %p254
      %p256 = scmp.le.s32.totalorder 1, %s18
      %p257 = scmp.lt.s32.totalorder %s18, 3
      %p258 = pnand %p256, %p257
      %p259 = pneg %p258
      // Predicated region
      $region9: #{tpu_custom_call.1} parent=5 // pred_check
        _
      $region10: #{tpu_custom_call.1} parent=5 // pred_check_branch
        %261 = sbr.rel (%p258) target = $region12
      $region11: #{tpu_custom_call.1} parent=5 // pred_region
        %s262 = ssub.s32 %s18, 1
        // Predicated region
        $region13: #{tpu_custom_call.1} parent=11 // pred_check
          %p263 = pneg %p65
        $region14: #{tpu_custom_call.1} parent=11 // pred_check_branch
          %265 = sbr.rel (%p263) target = $region16
        $region15: #{tpu_custom_call.1} parent=11 // pred_region
          _
        $region16: #{tpu_custom_call.1} parent=11 // pred_fallthru
          _
        // Predicated region
        $region17: #{tpu_custom_call.1} parent=11 // pred_check
          %p266 = pneg %p86
        $region18: #{tpu_custom_call.1} parent=11 // pred_check_branch
          %268 = sbr.rel (%p266) target = $region20
        $region19: #{tpu_custom_call.1} parent=11 // pred_region
          _
        $region20: #{tpu_custom_call.1} parent=11 // pred_fallthru
          _
        // Predicated region
        $region21: #{tpu_custom_call.1} parent=11 // pred_check
          %p269 = pneg %p133
        $region22: #{tpu_custom_call.1} parent=11 // pred_check_branch
          %271 = sbr.rel (%p269) target = $region24
        $region23: #{tpu_custom_call.1} parent=11 // pred_region
          _
        $region24: #{tpu_custom_call.1} parent=11 // pred_fallthru
          _
        // Predicated region
        $region25: #{tpu_custom_call.1} parent=11 // pred_check
          %p272 = pneg %p154
        $region26: #{tpu_custom_call.1} parent=11 // pred_check_branch
          %274 = sbr.rel (%p272) target = $region28
        $region27: #{tpu_custom_call.1} parent=11 // pred_region
          _
        $region28: #{tpu_custom_call.1} parent=11 // pred_fallthru
          _
        // Predicated region
        $region29: #{tpu_custom_call.1} parent=11 // pred_check
          %p275 = pneg %p201
        $region30: #{tpu_custom_call.1} parent=11 // pred_check_branch
          %277 = sbr.rel (%p275) target = $region32
        $region31: #{tpu_custom_call.1} parent=11 // pred_region
          _
        $region32: #{tpu_custom_call.1} parent=11 // pred_fallthru
          _
        // Predicated region
        $region33: #{tpu_custom_call.1} parent=11 // pred_check
          %p278 = pneg %p222
        $region34: #{tpu_custom_call.1} parent=11 // pred_check_branch
          %280 = sbr.rel (%p278) target = $region36
        $region35: #{tpu_custom_call.1} parent=11 // pred_region
          _
        $region36: #{tpu_custom_call.1} parent=11 // pred_fallthru
          _
      $region12: #{tpu_custom_call.1} parent=5 // pred_fallthru
        _
      %p281 = scmp.lt.s32.totalorder %s18, 2
      // Predicated region
      $region37: #{tpu_custom_call.1} parent=5 // pred_check
        %p282 = pneg %p281
      $region38: #{tpu_custom_call.1} parent=5 // pred_check_branch
        %284 = sbr.rel (%p282) target = $region40
      $region39: #{tpu_custom_call.1} parent=5 // pred_region
        // Predicated region
        $region41: #{tpu_custom_call.1} parent=39 // pred_check
          %p285 = pneg %p38
        $region42: #{tpu_custom_call.1} parent=39 // pred_check_branch
          %287 = sbr.rel (%p285) target = $region44
        $region43: #{tpu_custom_call.1} parent=39 // pred_region
          %s288 = smul.u32 32, %s18
          %p289 = scmp.lt.s32.totalorder %s288, 63
          %s290 = scalar_select %p289, %s288, 63
          %s291 = smul.addr %s290, 8
          %s292 = scalar_lea.vmem %s0, %s291
          %s293 = smul.u32 32, %s18
        $region44: #{tpu_custom_call.1} parent=39 // pred_fallthru
          _
        // Predicated region
        $region45: #{tpu_custom_call.1} parent=39 // pred_check
          %p294 = pneg %p106
        $region46: #{tpu_custom_call.1} parent=39 // pred_check_branch
          %296 = sbr.rel (%p294) target = $region48
        $region47: #{tpu_custom_call.1} parent=39 // pred_region
          %s297 = smul.u32 32, %s18
          %p298 = scmp.lt.s32.totalorder %s297, 63
          %s299 = scalar_select %p298, %s297, 63
          %s300 = smul.addr %s299, 8
          %s301 = scalar_lea.vmem %s3, %s300
          %s302 = smul.u32 32, %s18
        $region48: #{tpu_custom_call.1} parent=39 // pred_fallthru
          _
        // Predicated region
        $region49: #{tpu_custom_call.1} parent=39 // pred_check
          %p303 = pneg %p174
        $region50: #{tpu_custom_call.1} parent=39 // pred_check_branch
          %305 = sbr.rel (%p303) target = $region52
        $region51: #{tpu_custom_call.1} parent=39 // pred_region
          %s306 = smul.u32 32, %s18
          %p307 = scmp.lt.s32.totalorder %s306, 63
          %s308 = scalar_select %p307, %s306, 63
          %s309 = smul.addr %s308, 8
          %s310 = scalar_lea.vmem %s6, %s309
          %s311 = smul.u32 32, %s18
        $region52: #{tpu_custom_call.1} parent=39 // pred_fallthru
          _
      $region40: #{tpu_custom_call.1} parent=5 // pred_fallthru
        _
      %p312 = scmp.le.s32.totalorder 1, %s18
      %p313 = scmp.lt.s32.totalorder %s18, 3
      %p314 = pnand %p312, %p313
      %p315 = pneg %p314
      // Predicated region
      $region53: #{tpu_custom_call.1} parent=5 // pred_check
        _
      $region54: #{tpu_custom_call.1} parent=5 // pred_check_branch
        %317 = sbr.rel (%p314) target = $region56
      $region55: #{tpu_custom_call.1} parent=5 // pred_region
        %s318 = ssub.s32 %s18, 1
        %s319 = smul.u32 32, %s23
        %p320 = scmp.lt.s32.totalorder %s319, 63
        %s321 = scalar_select %p320, %s319, 63
        %s322 = smul.addr %s321, 8
        %s323 = scalar_lea.vmem %s0, %s322
        %p324 = pneg %p44
        %p325 = pneg %p41
        %p326 = pneg %p65
        %p327 = pneg %p62
        %p328 = pneg %p86
        %p329 = pneg %p83
        %s330 = smul.u32 32, %s23
        %p331 = scmp.lt.s32.totalorder %s330, 63
        %s332 = scalar_select %p331, %s330, 63
        %s333 = smul.addr %s332, 8
        %s334 = scalar_lea.vmem %s3, %s333
        %p335 = pneg %p112
        %p336 = pneg %p109
        %p337 = pneg %p133
        %p338 = pneg %p130
        %p339 = pneg %p154
        %p340 = pneg %p151
        %s341 = smul.u32 32, %s23
        %p342 = scmp.lt.s32.totalorder %s341, 63
        %s343 = scalar_select %p342, %s341, 63
        %s344 = smul.addr %s343, 8
        %s345 = scalar_lea.vmem %s6, %s344
        %p346 = pneg %p180
        %p347 = pneg %p177
        %p348 = pneg %p201
        %p349 = pneg %p198
        %p350 = pneg %p222
        %p351 = pneg %p219
        %p352 = pneg %p248
        %p353 = pneg %p245
        %s354 = sand.u32 %s235, 1
        %s355 = scalar_lea.sflag [#allocation3], %s354
        %s356 = sand.u32 %s235, 1
        %s357 = smul.addr %s356, 4
        %s358 = scalar_lea.vmem [#allocation2], %s357
        %s359 = smul.u32 32, %s23
        %p360 = scmp.lt.s32.totalorder %s359, 63
        %s361 = scalar_select %p360, %s359, 63
        %s362 = smul.addr %s361, 8
        %s363 = scalar_lea.vmem %s0, %s362
        %s364 = smul.u32 32, %s23
        %s365 = smul.u32 32, %s23
        %p366 = scmp.lt.s32.totalorder %s365, 63
        %s367 = scalar_select %p366, %s365, 63
        %s368 = smul.addr %s367, 8
        %s369 = scalar_lea.vmem %s3, %s368
        %s370 = smul.u32 32, %s23
        %s371 = smul.u32 32, %s23
        %p372 = scmp.lt.s32.totalorder %s371, 63
        %s373 = scalar_select %p372, %s371, 63
        %s374 = smul.addr %s373, 8
        %s375 = scalar_lea.vmem %s6, %s374
        %s376 = smul.u32 32, %s23
        %s377 = smul.u32 2, %s23
        %v378 = vld [vmem:[%s363] sm:$0xff]
        %v379 = vld [vmem:[%s363 + $0x8] sm:$0xff]
        %v380 = vld [vmem:[%s363 + $0x10] sm:$0xff]
        %v381 = vld [vmem:[%s363 + $0x18] sm:$0xff]
        %v382 = vld [vmem:[%s363 + $0x20] sm:$0xff]
        %v383 = vld [vmem:[%s363 + $0x28] sm:$0xff]
        %v384 = vld [vmem:[%s363 + $0x30] sm:$0xff]
        %v385 = vld [vmem:[%s363 + $0x38] sm:$0xff]
        %v386 = vld [vmem:[%s363 + $0x40] sm:$0xff]
        %v387 = vld [vmem:[%s363 + $0x48] sm:$0xff]
        %v388 = vld [vmem:[%s363 + $0x50] sm:$0xff]
        %v389 = vld [vmem:[%s363 + $0x58] sm:$0xff]
        %v390 = vld [vmem:[%s363 + $0x60] sm:$0xff]
        %v391 = vld [vmem:[%s363 + $0x68] sm:$0xff]
        %v392 = vld [vmem:[%s363 + $0x70] sm:$0xff]
        %v393 = vld [vmem:[%s363 + $0x78] sm:$0xff]
        %v394 = vld [vmem:[%s363 + $0x80] sm:$0xff]
        %v395 = vld [vmem:[%s363 + $0x88] sm:$0xff]
        %v396 = vld [vmem:[%s363 + $0x90] sm:$0xff]
        %v397 = vld [vmem:[%s363 + $0x98] sm:$0xff]
        %v398 = vld [vmem:[%s363 + $0xa0] sm:$0xff]
        %v399 = vld [vmem:[%s363 + $0xa8] sm:$0xff]
        %v400 = vld [vmem:[%s363 + $0xb0] sm:$0xff]
        %v401 = vld [vmem:[%s363 + $0xb8] sm:$0xff]
        %v402 = vld [vmem:[%s363 + $0xc0] sm:$0xff]
        %v403 = vld [vmem:[%s363 + $0xc8] sm:$0xff]
        %v404 = vld [vmem:[%s363 + $0xd0] sm:$0xff]
        %v405 = vld [vmem:[%s363 + $0xd8] sm:$0xff]
        %v406 = vld [vmem:[%s363 + $0xe0] sm:$0xff]
        %v407 = vld [vmem:[%s363 + $0xe8] sm:$0xff]
        %v408 = vld [vmem:[%s363 + $0xf0] sm:$0xff]
        %v409 = vld [vmem:[%s363 + $0xf8] sm:$0xff]
        %v410 = vld [vmem:[%s1] sm:$0xff]
        %v411 = vld [vmem:[%s1 + $0x8] sm:$0xff]
        %v412 = vld [vmem:[%s1 + $0x10] sm:$0xff]
        %v413 = vld [vmem:[%s1 + $0x18] sm:$0xff]
        %v414 = vld [vmem:[%s2] sm:$0x1]
        %v416 = vlaneseq
        %v417 = vshrl.u32 %v416, 7
        %v418 = vsub.s32 0, %v417
        %v419 = vrot.slane %v414, %v418
        %vm421 = vcmask 261120
        %v423 = vsel %vm421, %v378, 0
        %v426 = vsel %vm421, %v379, 0
        %v429 = vsel %vm421, %v380, 0
        %v432 = vsel %vm421, %v381, 0
        %v435 = vsel %vm421, %v382, 0
        %v438 = vsel %vm421, %v383, 0
        %v441 = vsel %vm421, %v384, 0
        %v444 = vsel %vm421, %v385, 0
        %v447 = vsel %vm421, %v386, 0
        %v450 = vsel %vm421, %v387, 0
        %v453 = vsel %vm421, %v388, 0
        %v456 = vsel %vm421, %v389, 0
        %v459 = vsel %vm421, %v390, 0
        %v462 = vsel %vm421, %v391, 0
        %v465 = vsel %vm421, %v392, 0
        %v468 = vsel %vm421, %v393, 0
        %v471 = vsel %vm421, %v394, 0
        %v474 = vsel %vm421, %v395, 0
        %v477 = vsel %vm421, %v396, 0
        %v480 = vsel %vm421, %v397, 0
        %v483 = vsel %vm421, %v398, 0
        %v486 = vsel %vm421, %v399, 0
        %v489 = vsel %vm421, %v400, 0
        %v492 = vsel %vm421, %v401, 0
        %v495 = vsel %vm421, %v402, 0
        %v498 = vsel %vm421, %v403, 0
        %v501 = vsel %vm421, %v404, 0
        %v504 = vsel %vm421, %v405, 0
        %v507 = vsel %vm421, %v406, 0
        %v510 = vsel %vm421, %v407, 0
        %v513 = vsel %vm421, %v408, 0
        %v516 = vsel %vm421, %v409, 0
        %518 = vmatprep.subr.mxu0 0.0
        %519 = vmatpush1.msra.mxu0 0.0
        %520 = vmatprep.subr.mxu0 0.0
        %521 = vmatpush1.msra.mxu0 0.0
        %522 = vmatprep.subr.mxu0 0.0
        %523 = vmatpush1.msra.mxu0 0.0
        %524 = vmatprep.subr.mxu0 0.0
        %525 = vmatpush1.msra.mxu0 0.0
        %526 = vmatprep.subr.mxu0 0.0
        %527 = vmatpush1.msra.mxu0 0.0
        %528 = vmatprep.subr.mxu0 0.0
        %529 = vmatpush1.msra.mxu0 0.0
        %530 = vmatprep.subr.mxu0 0.0
        %531 = vmatpush1.msra.mxu0 0.0
        %532 = vmatprep.subr.mxu0 0.0
        %533 = vmatpush1.msra.mxu0 0.0
        %534 = vmatprep.subr.mxu0 0.0
        %535 = vmatpush1.msra.mxu0 0.0
        %536 = vmatprep.subr.mxu0 0.0
        %537 = vmatpush1.msra.mxu0 0.0
        %538 = vmatprep.subr.mxu0 0.0
        %539 = vmatpush1.msra.mxu0 0.0
        %540 = vmatprep.subr.mxu0 0.0
        %541 = vmatpush1.msra.mxu0 0.0
        %542 = vmatprep.subr.mxu0 0.0
        %543 = vmatpush1.msra.mxu0 %v413
        %544 = vmatprep.subr.mxu0 0.0
        %545 = vmatpush1.msra.mxu0 %v412
        %546 = vmatprep.subr.mxu0 0.0
        %547 = vmatpush1.msra.mxu0 %v411
        %548 = vmatprep.subr.mxu0 0.0
        %549 = vmatpush1.msra.mxu0 %v410
        %550 = vmatprep.subr.mxu0 0.0
        %551 = vmatpush2.msra.mxu0 0.0
        %552 = vmatprep.subr.mxu0 0.0
        %553 = vmatpush2.msra.mxu0 0.0
        %554 = vmatprep.subr.mxu0 0.0
        %555 = vmatpush2.msra.mxu0 0.0
        %556 = vmatprep.subr.mxu0 0.0
        %557 = vmatpush2.msra.mxu0 0.0
        %558 = vmatprep.subr.mxu0 0.0
        %559 = vmatpush2.msra.mxu0 0.0
        %560 = vmatprep.subr.mxu0 0.0
        %561 = vmatpush2.msra.mxu0 0.0
        %562 = vmatprep.subr.mxu0 0.0
        %563 = vmatpush2.msra.mxu0 0.0
        %564 = vmatprep.subr.mxu0 0.0
        %565 = vmatpush2.msra.mxu0 0.0
        %566 = vmatprep.subr.mxu0 0.0
        %567 = vmatpush2.msra.mxu0 0.0
        %568 = vmatprep.subr.mxu0 0.0
        %569 = vmatpush2.msra.mxu0 0.0
        %570 = vmatprep.subr.mxu0 0.0
        %571 = vmatpush2.msra.mxu0 0.0
        %572 = vmatprep.subr.mxu0 0.0
        %573 = vmatpush2.msra.mxu0 0.0
        %574 = vmatprep.subr.mxu0 0.0
        %575 = vmatpush2.msra.mxu0 0.0
        %576 = vmatprep.subr.mxu0 0.0
        %577 = vmatpush2.msra.mxu0 0.0
        %578 = vmatprep.subr.mxu0 0.0
        %579 = vmatpush2.msra.mxu0 0.0
        %580 = vmatprep.subr.mxu0 0.0
        %581 = vmatpush2.msra.mxu0 0.0
        %582 = vmatprep.mubr.f32.mxu0 0.0
        %583 = vmatmul.mubr.f32.gmra.mxu0 %v423
        %v584 = vpop.f32.mrf.mxu0
        %v585 = vadd.f32 %v419, %v584
        %v586 = vpop.f32.mrf.mxu0
        %587 = vmatprep.mubr.f32.mxu0 0.0
        %588 = vmatmul.mubr.f32.gmra.mxu0 %v426
        %v589 = vpop.f32.mrf.mxu0
        %v590 = vadd.f32 %v419, %v589
        %v591 = vpop.f32.mrf.mxu0
        %592 = vmatprep.mubr.f32.mxu0 0.0
        %593 = vmatmul.mubr.f32.gmra.mxu0 %v429
        %v594 = vpop.f32.mrf.mxu0
        %v595 = vadd.f32 %v419, %v594
        %v596 = vpop.f32.mrf.mxu0
        %597 = vmatprep.mubr.f32.mxu0 0.0
        %598 = vmatmul.mubr.f32.gmra.mxu0 %v432
        %v599 = vpop.f32.mrf.mxu0
        %v600 = vadd.f32 %v419, %v599
        %v601 = vpop.f32.mrf.mxu0
        %602 = vmatprep.mubr.f32.mxu0 0.0
        %603 = vmatmul.mubr.f32.gmra.mxu0 %v435
        %v604 = vpop.f32.mrf.mxu0
        %v605 = vadd.f32 %v419, %v604
        %v606 = vpop.f32.mrf.mxu0
        %607 = vmatprep.mubr.f32.mxu0 0.0
        %608 = vmatmul.mubr.f32.gmra.mxu0 %v438
        %v609 = vpop.f32.mrf.mxu0
        %v610 = vadd.f32 %v419, %v609
        %v611 = vpop.f32.mrf.mxu0
        %612 = vmatprep.mubr.f32.mxu0 0.0
        %613 = vmatmul.mubr.f32.gmra.mxu0 %v441
        %v614 = vpop.f32.mrf.mxu0
        %v615 = vadd.f32 %v419, %v614
        %v616 = vpop.f32.mrf.mxu0
        %617 = vmatprep.mubr.f32.mxu0 0.0
        %618 = vmatmul.mubr.f32.gmra.mxu0 %v444
        %v619 = vpop.f32.mrf.mxu0
        %v620 = vadd.f32 %v419, %v619
        %v621 = vpop.f32.mrf.mxu0
        %622 = vmatprep.mubr.f32.mxu0 0.0
        %623 = vmatmul.mubr.f32.gmra.mxu0 %v447
        %v624 = vpop.f32.mrf.mxu0
        %v625 = vadd.f32 %v419, %v624
        %v626 = vpop.f32.mrf.mxu0
        %627 = vmatprep.mubr.f32.mxu0 0.0
        %628 = vmatmul.mubr.f32.gmra.mxu0 %v450
        %v629 = vpop.f32.mrf.mxu0
        %v630 = vadd.f32 %v419, %v629
        %v631 = vpop.f32.mrf.mxu0
        %632 = vmatprep.mubr.f32.mxu0 0.0
        %633 = vmatmul.mubr.f32.gmra.mxu0 %v453
        %v634 = vpop.f32.mrf.mxu0
        %v635 = vadd.f32 %v419, %v634
        %v636 = vpop.f32.mrf.mxu0
        %637 = vmatprep.mubr.f32.mxu0 0.0
        %638 = vmatmul.mubr.f32.gmra.mxu0 %v456
        %v639 = vpop.f32.mrf.mxu0
        %v640 = vadd.f32 %v419, %v639
        %v641 = vpop.f32.mrf.mxu0
        %642 = vmatprep.mubr.f32.mxu0 0.0
        %643 = vmatmul.mubr.f32.gmra.mxu0 %v459
        %v644 = vpop.f32.mrf.mxu0
        %v645 = vadd.f32 %v419, %v644
        %v646 = vpop.f32.mrf.mxu0
        %647 = vmatprep.mubr.f32.mxu0 0.0
        %648 = vmatmul.mubr.f32.gmra.mxu0 %v462
        %v649 = vpop.f32.mrf.mxu0
        %v650 = vadd.f32 %v419, %v649
        %v651 = vpop.f32.mrf.mxu0
        %652 = vmatprep.mubr.f32.mxu0 0.0
        %653 = vmatmul.mubr.f32.gmra.mxu0 %v465
        %v654 = vpop.f32.mrf.mxu0
        %v655 = vadd.f32 %v419, %v654
        %v656 = vpop.f32.mrf.mxu0
        %657 = vmatprep.mubr.f32.mxu0 0.0
        %658 = vmatmul.mubr.f32.gmra.mxu0 %v468
        %v659 = vpop.f32.mrf.mxu0
        %v660 = vadd.f32 %v419, %v659
        %v661 = vpop.f32.mrf.mxu0
        %662 = vmatprep.mubr.f32.mxu0 0.0
        %663 = vmatmul.mubr.f32.gmra.mxu0 %v471
        %v664 = vpop.f32.mrf.mxu0
        %v665 = vadd.f32 %v419, %v664
        %v666 = vpop.f32.mrf.mxu0
        %667 = vmatprep.mubr.f32.mxu0 0.0
        %668 = vmatmul.mubr.f32.gmra.mxu0 %v474
        %v669 = vpop.f32.mrf.mxu0
        %v670 = vadd.f32 %v419, %v669
        %v671 = vpop.f32.mrf.mxu0
        %672 = vmatprep.mubr.f32.mxu0 0.0
        %673 = vmatmul.mubr.f32.gmra.mxu0 %v477
        %v674 = vpop.f32.mrf.mxu0
        %v675 = vadd.f32 %v419, %v674
        %v676 = vpop.f32.mrf.mxu0
        %677 = vmatprep.mubr.f32.mxu0 0.0
        %678 = vmatmul.mubr.f32.gmra.mxu0 %v480
        %v679 = vpop.f32.mrf.mxu0
        %v680 = vadd.f32 %v419, %v679
        %v681 = vpop.f32.mrf.mxu0
        %682 = vmatprep.mubr.f32.mxu0 0.0
        %683 = vmatmul.mubr.f32.gmra.mxu0 %v483
        %v684 = vpop.f32.mrf.mxu0
        %v685 = vadd.f32 %v419, %v684
        %v686 = vpop.f32.mrf.mxu0
        %687 = vmatprep.mubr.f32.mxu0 0.0
        %688 = vmatmul.mubr.f32.gmra.mxu0 %v486
        %v689 = vpop.f32.mrf.mxu0
        %v690 = vadd.f32 %v419, %v689
        %v691 = vpop.f32.mrf.mxu0
        %692 = vmatprep.mubr.f32.mxu0 0.0
        %693 = vmatmul.mubr.f32.gmra.mxu0 %v489
        %v694 = vpop.f32.mrf.mxu0
        %v695 = vadd.f32 %v419, %v694
        %v696 = vpop.f32.mrf.mxu0
        %697 = vmatprep.mubr.f32.mxu0 0.0
        %698 = vmatmul.mubr.f32.gmra.mxu0 %v492
        %v699 = vpop.f32.mrf.mxu0
        %v700 = vadd.f32 %v419, %v699
        %v701 = vpop.f32.mrf.mxu0
        %702 = vmatprep.mubr.f32.mxu0 0.0
        %703 = vmatmul.mubr.f32.gmra.mxu0 %v495
        %v704 = vpop.f32.mrf.mxu0
        %v705 = vadd.f32 %v419, %v704
        %v706 = vpop.f32.mrf.mxu0
        %707 = vmatprep.mubr.f32.mxu0 0.0
        %708 = vmatmul.mubr.f32.gmra.mxu0 %v498
        %v709 = vpop.f32.mrf.mxu0
        %v710 = vadd.f32 %v419, %v709
        %v711 = vpop.f32.mrf.mxu0
        %712 = vmatprep.mubr.f32.mxu0 0.0
        %713 = vmatmul.mubr.f32.gmra.mxu0 %v501
        %v714 = vpop.f32.mrf.mxu0
        %v715 = vadd.f32 %v419, %v714
        %v716 = vpop.f32.mrf.mxu0
        %717 = vmatprep.mubr.f32.mxu0 0.0
        %718 = vmatmul.mubr.f32.gmra.mxu0 %v504
        %v719 = vpop.f32.mrf.mxu0
        %v720 = vadd.f32 %v419, %v719
        %v721 = vpop.f32.mrf.mxu0
        %722 = vmatprep.mubr.f32.mxu0 0.0
        %723 = vmatmul.mubr.f32.gmra.mxu0 %v507
        %v724 = vpop.f32.mrf.mxu0
        %v725 = vadd.f32 %v419, %v724
        %v726 = vpop.f32.mrf.mxu0
        %727 = vmatprep.mubr.f32.mxu0 0.0
        %728 = vmatmul.mubr.f32.gmra.mxu0 %v510
        %v729 = vpop.f32.mrf.mxu0
        %v730 = vadd.f32 %v419, %v729
        %v731 = vpop.f32.mrf.mxu0
        %732 = vmatprep.mubr.f32.mxu0 0.0
        %733 = vmatmul.mubr.f32.gmra.mxu0 %v513
        %v734 = vpop.f32.mrf.mxu0
        %v735 = vadd.f32 %v419, %v734
        %v736 = vpop.f32.mrf.mxu0
        %737 = vmatprep.mubr.f32.mxu0 0.0
        %738 = vmatmul.mubr.f32.gmra.mxu0 %v516
        %v739 = vpop.f32.mrf.mxu0
        %v740 = vadd.f32 %v419, %v739
        %v741 = vpop.f32.mrf.mxu0
        %742 = vdwg.mxu0
        %vm743 = vcmp.gt.f32.partialorder %v585, 0.0
        %vm744 = vcmp.gt.f32.partialorder %v590, 0.0
        %vm745 = vcmp.gt.f32.partialorder %v595, 0.0
        %vm746 = vcmp.gt.f32.partialorder %v600, 0.0
        %vm747 = vcmp.gt.f32.partialorder %v605, 0.0
        %vm748 = vcmp.gt.f32.partialorder %v610, 0.0
        %vm749 = vcmp.gt.f32.partialorder %v615, 0.0
        %vm750 = vcmp.gt.f32.partialorder %v620, 0.0
        %vm751 = vcmp.gt.f32.partialorder %v625, 0.0
        %vm752 = vcmp.gt.f32.partialorder %v630, 0.0
        %vm753 = vcmp.gt.f32.partialorder %v635, 0.0
        %vm754 = vcmp.gt.f32.partialorder %v640, 0.0
        %vm755 = vcmp.gt.f32.partialorder %v645, 0.0
        %vm756 = vcmp.gt.f32.partialorder %v650, 0.0
        %vm757 = vcmp.gt.f32.partialorder %v655, 0.0
        %vm758 = vcmp.gt.f32.partialorder %v660, 0.0
        %vm759 = vcmp.gt.f32.partialorder %v665, 0.0
        %vm760 = vcmp.gt.f32.partialorder %v670, 0.0
        %vm761 = vcmp.gt.f32.partialorder %v675, 0.0
        %vm762 = vcmp.gt.f32.partialorder %v680, 0.0
        %vm763 = vcmp.gt.f32.partialorder %v685, 0.0
        %vm764 = vcmp.gt.f32.partialorder %v690, 0.0
        %vm765 = vcmp.gt.f32.partialorder %v695, 0.0
        %vm766 = vcmp.gt.f32.partialorder %v700, 0.0
        %vm767 = vcmp.gt.f32.partialorder %v705, 0.0
        %vm768 = vcmp.gt.f32.partialorder %v710, 0.0
        %vm769 = vcmp.gt.f32.partialorder %v715, 0.0
        %vm770 = vcmp.gt.f32.partialorder %v720, 0.0
        %vm771 = vcmp.gt.f32.partialorder %v725, 0.0
        %vm772 = vcmp.gt.f32.partialorder %v730, 0.0
        %vm773 = vcmp.gt.f32.partialorder %v735, 0.0
        %vm774 = vcmp.gt.f32.partialorder %v740, 0.0
        %v775 = vmul.f32 %v585, 0.1
        %v776 = vmul.f32 %v590, 0.1
        %v777 = vmul.f32 %v595, 0.1
        %v778 = vmul.f32 %v600, 0.1
        %v779 = vmul.f32 %v605, 0.1
        %v780 = vmul.f32 %v610, 0.1
        %v781 = vmul.f32 %v615, 0.1
        %v782 = vmul.f32 %v620, 0.1
        %v783 = vmul.f32 %v625, 0.1
        %v784 = vmul.f32 %v630, 0.1
        %v785 = vmul.f32 %v635, 0.1
        %v786 = vmul.f32 %v640, 0.1
        %v787 = vmul.f32 %v645, 0.1
        %v788 = vmul.f32 %v650, 0.1
        %v789 = vmul.f32 %v655, 0.1
        %v790 = vmul.f32 %v660, 0.1
        %v791 = vmul.f32 %v665, 0.1
        %v792 = vmul.f32 %v670, 0.1
        %v793 = vmul.f32 %v675, 0.1
        %v794 = vmul.f32 %v680, 0.1
        %v795 = vmul.f32 %v685, 0.1
        %v796 = vmul.f32 %v690, 0.1
        %v797 = vmul.f32 %v695, 0.1
        %v798 = vmul.f32 %v700, 0.1
        %v799 = vmul.f32 %v705, 0.1
        %v800 = vmul.f32 %v710, 0.1
        %v801 = vmul.f32 %v715, 0.1
        %v802 = vmul.f32 %v720, 0.1
        %v803 = vmul.f32 %v725, 0.1
        %v804 = vmul.f32 %v730, 0.1
        %v805 = vmul.f32 %v735, 0.1
        %v806 = vmul.f32 %v740, 0.1
        %v807 = vsel %vm743, %v585, %v775
        %v808 = vsel %vm744, %v590, %v776
        %v809 = vsel %vm745, %v595, %v777
        %v810 = vsel %vm746, %v600, %v778
        %v811 = vsel %vm747, %v605, %v779
        %v812 = vsel %vm748, %v610, %v780
        %v813 = vsel %vm749, %v615, %v781
        %v814 = vsel %vm750, %v620, %v782
        %v815 = vsel %vm751, %v625, %v783
        %v816 = vsel %vm752, %v630, %v784
        %v817 = vsel %vm753, %v635, %v785
        %v818 = vsel %vm754, %v640, %v786
        %v819 = vsel %vm755, %v645, %v787
        %v820 = vsel %vm756, %v650, %v788
        %v821 = vsel %vm757, %v655, %v789
        %v822 = vsel %vm758, %v660, %v790
        %v823 = vsel %vm759, %v665, %v791
        %v824 = vsel %vm760, %v670, %v792
        %v825 = vsel %vm761, %v675, %v793
        %v826 = vsel %vm762, %v680, %v794
        %v827 = vsel %vm763, %v685, %v795
        %v828 = vsel %vm764, %v690, %v796
        %v829 = vsel %vm765, %v695, %v797
        %v830 = vsel %vm766, %v700, %v798
        %v831 = vsel %vm767, %v705, %v799
        %v832 = vsel %vm768, %v710, %v800
        %v833 = vsel %vm769, %v715, %v801
        %v834 = vsel %vm770, %v720, %v802
        %v835 = vsel %vm771, %v725, %v803
        %v836 = vsel %vm772, %v730, %v804
        %v837 = vsel %vm773, %v735, %v805
        %v838 = vsel %vm774, %v740, %v806
        %v839 = vld [vmem:[%s369] sm:$0xff]
        %v840 = vld [vmem:[%s369 + $0x8] sm:$0xff]
        %v841 = vld [vmem:[%s369 + $0x10] sm:$0xff]
        %v842 = vld [vmem:[%s369 + $0x18] sm:$0xff]
        %v843 = vld [vmem:[%s369 + $0x20] sm:$0xff]
        %v844 = vld [vmem:[%s369 + $0x28] sm:$0xff]
        %v845 = vld [vmem:[%s369 + $0x30] sm:$0xff]
        %v846 = vld [vmem:[%s369 + $0x38] sm:$0xff]
        %v847 = vld [vmem:[%s369 + $0x40] sm:$0xff]
        %v848 = vld [vmem:[%s369 + $0x48] sm:$0xff]
        %v849 = vld [vmem:[%s369 + $0x50] sm:$0xff]
        %v850 = vld [vmem:[%s369 + $0x58] sm:$0xff]
        %v851 = vld [vmem:[%s369 + $0x60] sm:$0xff]
        %v852 = vld [vmem:[%s369 + $0x68] sm:$0xff]
        %v853 = vld [vmem:[%s369 + $0x70] sm:$0xff]
        %v854 = vld [vmem:[%s369 + $0x78] sm:$0xff]
        %v855 = vld [vmem:[%s369 + $0x80] sm:$0xff]
        %v856 = vld [vmem:[%s369 + $0x88] sm:$0xff]
        %v857 = vld [vmem:[%s369 + $0x90] sm:$0xff]
        %v858 = vld [vmem:[%s369 + $0x98] sm:$0xff]
        %v859 = vld [vmem:[%s369 + $0xa0] sm:$0xff]
        %v860 = vld [vmem:[%s369 + $0xa8] sm:$0xff]
        %v861 = vld [vmem:[%s369 + $0xb0] sm:$0xff]
        %v862 = vld [vmem:[%s369 + $0xb8] sm:$0xff]
        %v863 = vld [vmem:[%s369 + $0xc0] sm:$0xff]
        %v864 = vld [vmem:[%s369 + $0xc8] sm:$0xff]
        %v865 = vld [vmem:[%s369 + $0xd0] sm:$0xff]
        %v866 = vld [vmem:[%s369 + $0xd8] sm:$0xff]
        %v867 = vld [vmem:[%s369 + $0xe0] sm:$0xff]
        %v868 = vld [vmem:[%s369 + $0xe8] sm:$0xff]
        %v869 = vld [vmem:[%s369 + $0xf0] sm:$0xff]
        %v870 = vld [vmem:[%s369 + $0xf8] sm:$0xff]
        %v871 = vmul.f32 %v807, %v839
        %v872 = vmul.f32 %v808, %v840
        %v873 = vmul.f32 %v809, %v841
        %v874 = vmul.f32 %v810, %v842
        %v875 = vmul.f32 %v811, %v843
        %v876 = vmul.f32 %v812, %v844
        %v877 = vmul.f32 %v813, %v845
        %v878 = vmul.f32 %v814, %v846
        %v879 = vmul.f32 %v815, %v847
        %v880 = vmul.f32 %v816, %v848
        %v881 = vmul.f32 %v817, %v849
        %v882 = vmul.f32 %v818, %v850
        %v883 = vmul.f32 %v819, %v851
        %v884 = vmul.f32 %v820, %v852
        %v885 = vmul.f32 %v821, %v853
        %v886 = vmul.f32 %v822, %v854
        %v887 = vmul.f32 %v823, %v855
        %v888 = vmul.f32 %v824, %v856
        %v889 = vmul.f32 %v825, %v857
        %v890 = vmul.f32 %v826, %v858
        %v891 = vmul.f32 %v827, %v859
        %v892 = vmul.f32 %v828, %v860
        %v893 = vmul.f32 %v829, %v861
        %v894 = vmul.f32 %v830, %v862
        %v895 = vmul.f32 %v831, %v863
        %v896 = vmul.f32 %v832, %v864
        %v897 = vmul.f32 %v833, %v865
        %v898 = vmul.f32 %v834, %v866
        %v899 = vmul.f32 %v835, %v867
        %v900 = vmul.f32 %v836, %v868
        %v901 = vmul.f32 %v837, %v869
        %v902 = vmul.f32 %v838, %v870
        %v903 = vld [vmem:[%s4] sm:$0xff]
        %v904 = vld [vmem:[%s4 + $0x8] sm:$0xff]
        %v905 = vld [vmem:[%s4 + $0x10] sm:$0xff]
        %v906 = vld [vmem:[%s4 + $0x18] sm:$0xff]
        %v907 = vld [vmem:[%s4 + $0x20] sm:$0xff]
        %v908 = vld [vmem:[%s4 + $0x28] sm:$0xff]
        %v909 = vld [vmem:[%s4 + $0x30] sm:$0xff]
        %v910 = vld [vmem:[%s4 + $0x38] sm:$0xff]
        %v911 = vld [vmem:[%s5] sm:$0x1]
        %v913 = vlaneseq
        %v914 = vshrl.u32 %v913, 7
        %v915 = vsub.s32 0, %v914
        %v916 = vrot.slane %v911, %v915
        %vm918 = vcmask 523264
        %v920 = vsel %vm918, %v871, 0
        %v923 = vsel %vm918, %v872, 0
        %v926 = vsel %vm918, %v873, 0
        %v929 = vsel %vm918, %v874, 0
        %v932 = vsel %vm918, %v875, 0
        %v935 = vsel %vm918, %v876, 0
        %v938 = vsel %vm918, %v877, 0
        %v941 = vsel %vm918, %v878, 0
        %v944 = vsel %vm918, %v879, 0
        %v947 = vsel %vm918, %v880, 0
        %v950 = vsel %vm918, %v881, 0
        %v953 = vsel %vm918, %v882, 0
        %v956 = vsel %vm918, %v883, 0
        %v959 = vsel %vm918, %v884, 0
        %v962 = vsel %vm918, %v885, 0
        %v965 = vsel %vm918, %v886, 0
        %v968 = vsel %vm918, %v887, 0
        %v971 = vsel %vm918, %v888, 0
        %v974 = vsel %vm918, %v889, 0
        %v977 = vsel %vm918, %v890, 0
        %v980 = vsel %vm918, %v891, 0
        %v983 = vsel %vm918, %v892, 0
        %v986 = vsel %vm918, %v893, 0
        %v989 = vsel %vm918, %v894, 0
        %v992 = vsel %vm918, %v895, 0
        %v995 = vsel %vm918, %v896, 0
        %v998 = vsel %vm918, %v897, 0
        %v1001 = vsel %vm918, %v898, 0
        %v1004 = vsel %vm918, %v899, 0
        %v1007 = vsel %vm918, %v900, 0
        %v1010 = vsel %vm918, %v901, 0
        %v1013 = vsel %vm918, %v902, 0
        %1015 = vmatprep.subr.mxu0 0.0
        %1016 = vmatpush1.msra.mxu0 0.0
        %1017 = vmatprep.subr.mxu0 0.0
        %1018 = vmatpush1.msra.mxu0 0.0
        %1019 = vmatprep.subr.mxu0 0.0
        %1020 = vmatpush1.msra.mxu0 0.0
        %1021 = vmatprep.subr.mxu0 0.0
        %1022 = vmatpush1.msra.mxu0 0.0
        %1023 = vmatprep.subr.mxu0 0.0
        %1024 = vmatpush1.msra.mxu0 0.0
        %1025 = vmatprep.subr.mxu0 0.0
        %1026 = vmatpush1.msra.mxu0 0.0
        %1027 = vmatprep.subr.mxu0 0.0
        %1028 = vmatpush1.msra.mxu0 0.0
        %1029 = vmatprep.subr.mxu0 0.0
        %1030 = vmatpush1.msra.mxu0 0.0
        %1031 = vmatprep.subr.mxu0 0.0
        %1032 = vmatpush1.msra.mxu0 %v910
        %1033 = vmatprep.subr.mxu0 0.0
        %1034 = vmatpush1.msra.mxu0 %v909
        %1035 = vmatprep.subr.mxu0 0.0
        %1036 = vmatpush1.msra.mxu0 %v908
        %1037 = vmatprep.subr.mxu0 0.0
        %1038 = vmatpush1.msra.mxu0 %v907
        %1039 = vmatprep.subr.mxu0 0.0
        %1040 = vmatpush1.msra.mxu0 %v906
        %1041 = vmatprep.subr.mxu0 0.0
        %1042 = vmatpush1.msra.mxu0 %v905
        %1043 = vmatprep.subr.mxu0 0.0
        %1044 = vmatpush1.msra.mxu0 %v904
        %1045 = vmatprep.subr.mxu0 0.0
        %1046 = vmatpush1.msra.mxu0 %v903
        %1047 = vmatprep.subr.mxu0 0.0
        %1048 = vmatpush2.msra.mxu0 0.0
        %1049 = vmatprep.subr.mxu0 0.0
        %1050 = vmatpush2.msra.mxu0 0.0
        %1051 = vmatprep.subr.mxu0 0.0
        %1052 = vmatpush2.msra.mxu0 0.0
        %1053 = vmatprep.subr.mxu0 0.0
        %1054 = vmatpush2.msra.mxu0 0.0
        %1055 = vmatprep.subr.mxu0 0.0
        %1056 = vmatpush2.msra.mxu0 0.0
        %1057 = vmatprep.subr.mxu0 0.0
        %1058 = vmatpush2.msra.mxu0 0.0
        %1059 = vmatprep.subr.mxu0 0.0
        %1060 = vmatpush2.msra.mxu0 0.0
        %1061 = vmatprep.subr.mxu0 0.0
        %1062 = vmatpush2.msra.mxu0 0.0
        %1063 = vmatprep.subr.mxu0 0.0
        %1064 = vmatpush2.msra.mxu0 0.0
        %1065 = vmatprep.subr.mxu0 0.0
        %1066 = vmatpush2.msra.mxu0 0.0
        %1067 = vmatprep.subr.mxu0 0.0
        %1068 = vmatpush2.msra.mxu0 0.0
        %1069 = vmatprep.subr.mxu0 0.0
        %1070 = vmatpush2.msra.mxu0 0.0
        %1071 = vmatprep.subr.mxu0 0.0
        %1072 = vmatpush2.msra.mxu0 0.0
        %1073 = vmatprep.subr.mxu0 0.0
        %1074 = vmatpush2.msra.mxu0 0.0
        %1075 = vmatprep.subr.mxu0 0.0
        %1076 = vmatpush2.msra.mxu0 0.0
        %1077 = vmatprep.subr.mxu0 0.0
        %1078 = vmatpush2.msra.mxu0 0.0
        %1079 = vmatprep.mubr.f32.mxu0 0.0
        %1080 = vmatmul.mubr.f32.gmra.mxu0 %v920
        %v1081 = vpop.f32.mrf.mxu0
        %v1082 = vadd.f32 %v916, %v1081
        %v1083 = vpop.f32.mrf.mxu0
        %1084 = vmatprep.mubr.f32.mxu0 0.0
        %1085 = vmatmul.mubr.f32.gmra.mxu0 %v923
        %v1086 = vpop.f32.mrf.mxu0
        %v1087 = vadd.f32 %v916, %v1086
        %v1088 = vpop.f32.mrf.mxu0
        %1089 = vmatprep.mubr.f32.mxu0 0.0
        %1090 = vmatmul.mubr.f32.gmra.mxu0 %v926
        %v1091 = vpop.f32.mrf.mxu0
        %v1092 = vadd.f32 %v916, %v1091
        %v1093 = vpop.f32.mrf.mxu0
        %1094 = vmatprep.mubr.f32.mxu0 0.0
        %1095 = vmatmul.mubr.f32.gmra.mxu0 %v929
        %v1096 = vpop.f32.mrf.mxu0
        %v1097 = vadd.f32 %v916, %v1096
        %v1098 = vpop.f32.mrf.mxu0
        %1099 = vmatprep.mubr.f32.mxu0 0.0
        %1100 = vmatmul.mubr.f32.gmra.mxu0 %v932
        %v1101 = vpop.f32.mrf.mxu0
        %v1102 = vadd.f32 %v916, %v1101
        %v1103 = vpop.f32.mrf.mxu0
        %1104 = vmatprep.mubr.f32.mxu0 0.0
        %1105 = vmatmul.mubr.f32.gmra.mxu0 %v935
        %v1106 = vpop.f32.mrf.mxu0
        %v1107 = vadd.f32 %v916, %v1106
        %v1108 = vpop.f32.mrf.mxu0
        %1109 = vmatprep.mubr.f32.mxu0 0.0
        %1110 = vmatmul.mubr.f32.gmra.mxu0 %v938
        %v1111 = vpop.f32.mrf.mxu0
        %v1112 = vadd.f32 %v916, %v1111
        %v1113 = vpop.f32.mrf.mxu0
        %1114 = vmatprep.mubr.f32.mxu0 0.0
        %1115 = vmatmul.mubr.f32.gmra.mxu0 %v941
        %v1116 = vpop.f32.mrf.mxu0
        %v1117 = vadd.f32 %v916, %v1116
        %v1118 = vpop.f32.mrf.mxu0
        %1119 = vmatprep.mubr.f32.mxu0 0.0
        %1120 = vmatmul.mubr.f32.gmra.mxu0 %v944
        %v1121 = vpop.f32.mrf.mxu0
        %v1122 = vadd.f32 %v916, %v1121
        %v1123 = vpop.f32.mrf.mxu0
        %1124 = vmatprep.mubr.f32.mxu0 0.0
        %1125 = vmatmul.mubr.f32.gmra.mxu0 %v947
        %v1126 = vpop.f32.mrf.mxu0
        %v1127 = vadd.f32 %v916, %v1126
        %v1128 = vpop.f32.mrf.mxu0
        %1129 = vmatprep.mubr.f32.mxu0 0.0
        %1130 = vmatmul.mubr.f32.gmra.mxu0 %v950
        %v1131 = vpop.f32.mrf.mxu0
        %v1132 = vadd.f32 %v916, %v1131
        %v1133 = vpop.f32.mrf.mxu0
        %1134 = vmatprep.mubr.f32.mxu0 0.0
        %1135 = vmatmul.mubr.f32.gmra.mxu0 %v953
        %v1136 = vpop.f32.mrf.mxu0
        %v1137 = vadd.f32 %v916, %v1136
        %v1138 = vpop.f32.mrf.mxu0
        %1139 = vmatprep.mubr.f32.mxu0 0.0
        %1140 = vmatmul.mubr.f32.gmra.mxu0 %v956
        %v1141 = vpop.f32.mrf.mxu0
        %v1142 = vadd.f32 %v916, %v1141
        %v1143 = vpop.f32.mrf.mxu0
        %1144 = vmatprep.mubr.f32.mxu0 0.0
        %1145 = vmatmul.mubr.f32.gmra.mxu0 %v959
        %v1146 = vpop.f32.mrf.mxu0
        %v1147 = vadd.f32 %v916, %v1146
        %v1148 = vpop.f32.mrf.mxu0
        %1149 = vmatprep.mubr.f32.mxu0 0.0
        %1150 = vmatmul.mubr.f32.gmra.mxu0 %v962
        %v1151 = vpop.f32.mrf.mxu0
        %v1152 = vadd.f32 %v916, %v1151
        %v1153 = vpop.f32.mrf.mxu0
        %1154 = vmatprep.mubr.f32.mxu0 0.0
        %1155 = vmatmul.mubr.f32.gmra.mxu0 %v965
        %v1156 = vpop.f32.mrf.mxu0
        %v1157 = vadd.f32 %v916, %v1156
        %v1158 = vpop.f32.mrf.mxu0
        %1159 = vmatprep.mubr.f32.mxu0 0.0
        %1160 = vmatmul.mubr.f32.gmra.mxu0 %v968
        %v1161 = vpop.f32.mrf.mxu0
        %v1162 = vadd.f32 %v916, %v1161
        %v1163 = vpop.f32.mrf.mxu0
        %1164 = vmatprep.mubr.f32.mxu0 0.0
        %1165 = vmatmul.mubr.f32.gmra.mxu0 %v971
        %v1166 = vpop.f32.mrf.mxu0
        %v1167 = vadd.f32 %v916, %v1166
        %v1168 = vpop.f32.mrf.mxu0
        %1169 = vmatprep.mubr.f32.mxu0 0.0
        %1170 = vmatmul.mubr.f32.gmra.mxu0 %v974
        %v1171 = vpop.f32.mrf.mxu0
        %v1172 = vadd.f32 %v916, %v1171
        %v1173 = vpop.f32.mrf.mxu0
        %1174 = vmatprep.mubr.f32.mxu0 0.0
        %1175 = vmatmul.mubr.f32.gmra.mxu0 %v977
        %v1176 = vpop.f32.mrf.mxu0
        %v1177 = vadd.f32 %v916, %v1176
        %v1178 = vpop.f32.mrf.mxu0
        %1179 = vmatprep.mubr.f32.mxu0 0.0
        %1180 = vmatmul.mubr.f32.gmra.mxu0 %v980
        %v1181 = vpop.f32.mrf.mxu0
        %v1182 = vadd.f32 %v916, %v1181
        %v1183 = vpop.f32.mrf.mxu0
        %1184 = vmatprep.mubr.f32.mxu0 0.0
        %1185 = vmatmul.mubr.f32.gmra.mxu0 %v983
        %v1186 = vpop.f32.mrf.mxu0
        %v1187 = vadd.f32 %v916, %v1186
        %v1188 = vpop.f32.mrf.mxu0
        %1189 = vmatprep.mubr.f32.mxu0 0.0
        %1190 = vmatmul.mubr.f32.gmra.mxu0 %v986
        %v1191 = vpop.f32.mrf.mxu0
        %v1192 = vadd.f32 %v916, %v1191
        %v1193 = vpop.f32.mrf.mxu0
        %1194 = vmatprep.mubr.f32.mxu0 0.0
        %1195 = vmatmul.mubr.f32.gmra.mxu0 %v989
        %v1196 = vpop.f32.mrf.mxu0
        %v1197 = vadd.f32 %v916, %v1196
        %v1198 = vpop.f32.mrf.mxu0
        %1199 = vmatprep.mubr.f32.mxu0 0.0
        %1200 = vmatmul.mubr.f32.gmra.mxu0 %v992
        %v1201 = vpop.f32.mrf.mxu0
        %v1202 = vadd.f32 %v916, %v1201
        %v1203 = vpop.f32.mrf.mxu0
        %1204 = vmatprep.mubr.f32.mxu0 0.0
        %1205 = vmatmul.mubr.f32.gmra.mxu0 %v995
        %v1206 = vpop.f32.mrf.mxu0
        %v1207 = vadd.f32 %v916, %v1206
        %v1208 = vpop.f32.mrf.mxu0
        %1209 = vmatprep.mubr.f32.mxu0 0.0
        %1210 = vmatmul.mubr.f32.gmra.mxu0 %v998
        %v1211 = vpop.f32.mrf.mxu0
        %v1212 = vadd.f32 %v916, %v1211
        %v1213 = vpop.f32.mrf.mxu0
        %1214 = vmatprep.mubr.f32.mxu0 0.0
        %1215 = vmatmul.mubr.f32.gmra.mxu0 %v1001
        %v1216 = vpop.f32.mrf.mxu0
        %v1217 = vadd.f32 %v916, %v1216
        %v1218 = vpop.f32.mrf.mxu0
        %1219 = vmatprep.mubr.f32.mxu0 0.0
        %1220 = vmatmul.mubr.f32.gmra.mxu0 %v1004
        %v1221 = vpop.f32.mrf.mxu0
        %v1222 = vadd.f32 %v916, %v1221
        %v1223 = vpop.f32.mrf.mxu0
        %1224 = vmatprep.mubr.f32.mxu0 0.0
        %1225 = vmatmul.mubr.f32.gmra.mxu0 %v1007
        %v1226 = vpop.f32.mrf.mxu0
        %v1227 = vadd.f32 %v916, %v1226
        %v1228 = vpop.f32.mrf.mxu0
        %1229 = vmatprep.mubr.f32.mxu0 0.0
        %1230 = vmatmul.mubr.f32.gmra.mxu0 %v1010
        %v1231 = vpop.f32.mrf.mxu0
        %v1232 = vadd.f32 %v916, %v1231
        %v1233 = vpop.f32.mrf.mxu0
        %1234 = vmatprep.mubr.f32.mxu0 0.0
        %1235 = vmatmul.mubr.f32.gmra.mxu0 %v1013
        %v1236 = vpop.f32.mrf.mxu0
        %v1237 = vadd.f32 %v916, %v1236
        %v1238 = vpop.f32.mrf.mxu0
        %1239 = vdwg.mxu0
        %vm1240 = vcmp.gt.f32.partialorder %v1082, 0.0
        %vm1241 = vcmp.gt.f32.partialorder %v1087, 0.0
        %vm1242 = vcmp.gt.f32.partialorder %v1092, 0.0
        %vm1243 = vcmp.gt.f32.partialorder %v1097, 0.0
        %vm1244 = vcmp.gt.f32.partialorder %v1102, 0.0
        %vm1245 = vcmp.gt.f32.partialorder %v1107, 0.0
        %vm1246 = vcmp.gt.f32.partialorder %v1112, 0.0
        %vm1247 = vcmp.gt.f32.partialorder %v1117, 0.0
        %vm1248 = vcmp.gt.f32.partialorder %v1122, 0.0
        %vm1249 = vcmp.gt.f32.partialorder %v1127, 0.0
        %vm1250 = vcmp.gt.f32.partialorder %v1132, 0.0
        %vm1251 = vcmp.gt.f32.partialorder %v1137, 0.0
        %vm1252 = vcmp.gt.f32.partialorder %v1142, 0.0
        %vm1253 = vcmp.gt.f32.partialorder %v1147, 0.0
        %vm1254 = vcmp.gt.f32.partialorder %v1152, 0.0
        %vm1255 = vcmp.gt.f32.partialorder %v1157, 0.0
        %vm1256 = vcmp.gt.f32.partialorder %v1162, 0.0
        %vm1257 = vcmp.gt.f32.partialorder %v1167, 0.0
        %vm1258 = vcmp.gt.f32.partialorder %v1172, 0.0
        %vm1259 = vcmp.gt.f32.partialorder %v1177, 0.0
        %vm1260 = vcmp.gt.f32.partialorder %v1182, 0.0
        %vm1261 = vcmp.gt.f32.partialorder %v1187, 0.0
        %vm1262 = vcmp.gt.f32.partialorder %v1192, 0.0
        %vm1263 = vcmp.gt.f32.partialorder %v1197, 0.0
        %vm1264 = vcmp.gt.f32.partialorder %v1202, 0.0
        %vm1265 = vcmp.gt.f32.partialorder %v1207, 0.0
        %vm1266 = vcmp.gt.f32.partialorder %v1212, 0.0
        %vm1267 = vcmp.gt.f32.partialorder %v1217, 0.0
        %vm1268 = vcmp.gt.f32.partialorder %v1222, 0.0
        %vm1269 = vcmp.gt.f32.partialorder %v1227, 0.0
        %vm1270 = vcmp.gt.f32.partialorder %v1232, 0.0
        %vm1271 = vcmp.gt.f32.partialorder %v1237, 0.0
        %v1272 = vmul.f32 %v1082, 0.1
        %v1273 = vmul.f32 %v1087, 0.1
        %v1274 = vmul.f32 %v1092, 0.1
        %v1275 = vmul.f32 %v1097, 0.1
        %v1276 = vmul.f32 %v1102, 0.1
        %v1277 = vmul.f32 %v1107, 0.1
        %v1278 = vmul.f32 %v1112, 0.1
        %v1279 = vmul.f32 %v1117, 0.1
        %v1280 = vmul.f32 %v1122, 0.1
        %v1281 = vmul.f32 %v1127, 0.1
        %v1282 = vmul.f32 %v1132, 0.1
        %v1283 = vmul.f32 %v1137, 0.1
        %v1284 = vmul.f32 %v1142, 0.1
        %v1285 = vmul.f32 %v1147, 0.1
        %v1286 = vmul.f32 %v1152, 0.1
        %v1287 = vmul.f32 %v1157, 0.1
        %v1288 = vmul.f32 %v1162, 0.1
        %v1289 = vmul.f32 %v1167, 0.1
        %v1290 = vmul.f32 %v1172, 0.1
        %v1291 = vmul.f32 %v1177, 0.1
        %v1292 = vmul.f32 %v1182, 0.1
        %v1293 = vmul.f32 %v1187, 0.1
        %v1294 = vmul.f32 %v1192, 0.1
        %v1295 = vmul.f32 %v1197, 0.1
        %v1296 = vmul.f32 %v1202, 0.1
        %v1297 = vmul.f32 %v1207, 0.1
        %v1298 = vmul.f32 %v1212, 0.1
        %v1299 = vmul.f32 %v1217, 0.1
        %v1300 = vmul.f32 %v1222, 0.1
        %v1301 = vmul.f32 %v1227, 0.1
        %v1302 = vmul.f32 %v1232, 0.1
        %v1303 = vmul.f32 %v1237, 0.1
        %v1304 = vsel %vm1240, %v1082, %v1272
        %v1305 = vsel %vm1241, %v1087, %v1273
        %v1306 = vsel %vm1242, %v1092, %v1274
        %v1307 = vsel %vm1243, %v1097, %v1275
        %v1308 = vsel %vm1244, %v1102, %v1276
        %v1309 = vsel %vm1245, %v1107, %v1277
        %v1310 = vsel %vm1246, %v1112, %v1278
        %v1311 = vsel %vm1247, %v1117, %v1279
        %v1312 = vsel %vm1248, %v1122, %v1280
        %v1313 = vsel %vm1249, %v1127, %v1281
        %v1314 = vsel %vm1250, %v1132, %v1282
        %v1315 = vsel %vm1251, %v1137, %v1283
        %v1316 = vsel %vm1252, %v1142, %v1284
        %v1317 = vsel %vm1253, %v1147, %v1285
        %v1318 = vsel %vm1254, %v1152, %v1286
        %v1319 = vsel %vm1255, %v1157, %v1287
        %v1320 = vsel %vm1256, %v1162, %v1288
        %v1321 = vsel %vm1257, %v1167, %v1289
        %v1322 = vsel %vm1258, %v1172, %v1290
        %v1323 = vsel %vm1259, %v1177, %v1291
        %v1324 = vsel %vm1260, %v1182, %v1292
        %v1325 = vsel %vm1261, %v1187, %v1293
        %v1326 = vsel %vm1262, %v1192, %v1294
        %v1327 = vsel %vm1263, %v1197, %v1295
        %v1328 = vsel %vm1264, %v1202, %v1296
        %v1329 = vsel %vm1265, %v1207, %v1297
        %v1330 = vsel %vm1266, %v1212, %v1298
        %v1331 = vsel %vm1267, %v1217, %v1299
        %v1332 = vsel %vm1268, %v1222, %v1300
        %v1333 = vsel %vm1269, %v1227, %v1301
        %v1334 = vsel %vm1270, %v1232, %v1302
        %v1335 = vsel %vm1271, %v1237, %v1303
        %v1336 = vld [vmem:[%s375] sm:$0xff]
        %v1337 = vld [vmem:[%s375 + $0x8] sm:$0xff]
        %v1338 = vld [vmem:[%s375 + $0x10] sm:$0xff]
        %v1339 = vld [vmem:[%s375 + $0x18] sm:$0xff]
        %v1340 = vld [vmem:[%s375 + $0x20] sm:$0xff]
        %v1341 = vld [vmem:[%s375 + $0x28] sm:$0xff]
        %v1342 = vld [vmem:[%s375 + $0x30] sm:$0xff]
        %v1343 = vld [vmem:[%s375 + $0x38] sm:$0xff]
        %v1344 = vld [vmem:[%s375 + $0x40] sm:$0xff]
        %v1345 = vld [vmem:[%s375 + $0x48] sm:$0xff]
        %v1346 = vld [vmem:[%s375 + $0x50] sm:$0xff]
        %v1347 = vld [vmem:[%s375 + $0x58] sm:$0xff]
        %v1348 = vld [vmem:[%s375 + $0x60] sm:$0xff]
        %v1349 = vld [vmem:[%s375 + $0x68] sm:$0xff]
        %v1350 = vld [vmem:[%s375 + $0x70] sm:$0xff]
        %v1351 = vld [vmem:[%s375 + $0x78] sm:$0xff]
        %v1352 = vld [vmem:[%s375 + $0x80] sm:$0xff]
        %v1353 = vld [vmem:[%s375 + $0x88] sm:$0xff]
        %v1354 = vld [vmem:[%s375 + $0x90] sm:$0xff]
        %v1355 = vld [vmem:[%s375 + $0x98] sm:$0xff]
        %v1356 = vld [vmem:[%s375 + $0xa0] sm:$0xff]
        %v1357 = vld [vmem:[%s375 + $0xa8] sm:$0xff]
        %v1358 = vld [vmem:[%s375 + $0xb0] sm:$0xff]
        %v1359 = vld [vmem:[%s375 + $0xb8] sm:$0xff]
        %v1360 = vld [vmem:[%s375 + $0xc0] sm:$0xff]
        %v1361 = vld [vmem:[%s375 + $0xc8] sm:$0xff]
        %v1362 = vld [vmem:[%s375 + $0xd0] sm:$0xff]
        %v1363 = vld [vmem:[%s375 + $0xd8] sm:$0xff]
        %v1364 = vld [vmem:[%s375 + $0xe0] sm:$0xff]
        %v1365 = vld [vmem:[%s375 + $0xe8] sm:$0xff]
        %v1366 = vld [vmem:[%s375 + $0xf0] sm:$0xff]
        %v1367 = vld [vmem:[%s375 + $0xf8] sm:$0xff]
        %v1368 = vmul.f32 %v1304, %v1336
        %v1369 = vmul.f32 %v1305, %v1337
        %v1370 = vmul.f32 %v1306, %v1338
        %v1371 = vmul.f32 %v1307, %v1339
        %v1372 = vmul.f32 %v1308, %v1340
        %v1373 = vmul.f32 %v1309, %v1341
        %v1374 = vmul.f32 %v1310, %v1342
        %v1375 = vmul.f32 %v1311, %v1343
        %v1376 = vmul.f32 %v1312, %v1344
        %v1377 = vmul.f32 %v1313, %v1345
        %v1378 = vmul.f32 %v1314, %v1346
        %v1379 = vmul.f32 %v1315, %v1347
        %v1380 = vmul.f32 %v1316, %v1348
        %v1381 = vmul.f32 %v1317, %v1349
        %v1382 = vmul.f32 %v1318, %v1350
        %v1383 = vmul.f32 %v1319, %v1351
        %v1384 = vmul.f32 %v1320, %v1352
        %v1385 = vmul.f32 %v1321, %v1353
        %v1386 = vmul.f32 %v1322, %v1354
        %v1387 = vmul.f32 %v1323, %v1355
        %v1388 = vmul.f32 %v1324, %v1356
        %v1389 = vmul.f32 %v1325, %v1357
        %v1390 = vmul.f32 %v1326, %v1358
        %v1391 = vmul.f32 %v1327, %v1359
        %v1392 = vmul.f32 %v1328, %v1360
        %v1393 = vmul.f32 %v1329, %v1361
        %v1394 = vmul.f32 %v1330, %v1362
        %v1395 = vmul.f32 %v1331, %v1363
        %v1396 = vmul.f32 %v1332, %v1364
        %v1397 = vmul.f32 %v1333, %v1365
        %v1398 = vmul.f32 %v1334, %v1366
        %v1399 = vmul.f32 %v1335, %v1367
        %v1400 = vld [vmem:[%s7] sm:$0x3]
        %v1401 = vld [vmem:[%s8] sm:$0x3]
        %1403 = vset.pattern.permute.xlu0 0
        %1404 = vperm.xlu0 %1403, %v1401
        %v1405 = vpop.permute.xlu0 %1404
        %v1408 = vsel %vm421, %v1400, 0
        %v1411 = vsel %vm421, %v1368, 0
        %v1414 = vsel %vm421, %v1369, 0
        %v1417 = vsel %vm421, %v1370, 0
        %v1420 = vsel %vm421, %v1371, 0
        %v1423 = vsel %vm421, %v1372, 0
        %v1426 = vsel %vm421, %v1373, 0
        %v1429 = vsel %vm421, %v1374, 0
        %v1432 = vsel %vm421, %v1375, 0
        %v1435 = vsel %vm421, %v1376, 0
        %v1438 = vsel %vm421, %v1377, 0
        %v1441 = vsel %vm421, %v1378, 0
        %v1444 = vsel %vm421, %v1379, 0
        %v1447 = vsel %vm421, %v1380, 0
        %v1450 = vsel %vm421, %v1381, 0
        %v1453 = vsel %vm421, %v1382, 0
        %v1456 = vsel %vm421, %v1383, 0
        %v1459 = vsel %vm421, %v1384, 0
        %v1462 = vsel %vm421, %v1385, 0
        %v1465 = vsel %vm421, %v1386, 0
        %v1468 = vsel %vm421, %v1387, 0
        %v1471 = vsel %vm421, %v1388, 0
        %v1474 = vsel %vm421, %v1389, 0
        %v1477 = vsel %vm421, %v1390, 0
        %v1480 = vsel %vm421, %v1391, 0
        %v1483 = vsel %vm421, %v1392, 0
        %v1486 = vsel %vm421, %v1393, 0
        %v1489 = vsel %vm421, %v1394, 0
        %v1492 = vsel %vm421, %v1395, 0
        %v1495 = vsel %vm421, %v1396, 0
        %v1498 = vsel %vm421, %v1397, 0
        %v1501 = vsel %vm421, %v1398, 0
        %v1504 = vsel %vm421, %v1399, 0
        %1506 = vmatprep.subr.mxu0 0.0
        %1507 = vmatpush1.xpose.msra.mxu0 %v1456
        %1508 = vmatprep.subr.mxu0 0.0
        %1509 = vmatpush1.xpose.msra.mxu0 %v1453
        %1510 = vmatprep.subr.mxu0 0.0
        %1511 = vmatpush1.xpose.msra.mxu0 %v1450
        %1512 = vmatprep.subr.mxu0 0.0
        %1513 = vmatpush1.xpose.msra.mxu0 %v1447
        %1514 = vmatprep.subr.mxu0 0.0
        %1515 = vmatpush1.xpose.msra.mxu0 %v1444
        %1516 = vmatprep.subr.mxu0 0.0
        %1517 = vmatpush1.xpose.msra.mxu0 %v1441
        %1518 = vmatprep.subr.mxu0 0.0
        %1519 = vmatpush1.xpose.msra.mxu0 %v1438
        %1520 = vmatprep.subr.mxu0 0.0
        %1521 = vmatpush1.xpose.msra.mxu0 %v1435
        %1522 = vmatprep.subr.mxu0 0.0
        %1523 = vmatpush1.xpose.msra.mxu0 %v1432
        %1524 = vmatprep.subr.mxu0 0.0
        %1525 = vmatpush1.xpose.msra.mxu0 %v1429
        %1526 = vmatprep.subr.mxu0 0.0
        %1527 = vmatpush1.xpose.msra.mxu0 %v1426
        %1528 = vmatprep.subr.mxu0 0.0
        %1529 = vmatpush1.xpose.msra.mxu0 %v1423
        %1530 = vmatprep.subr.mxu0 0.0
        %1531 = vmatpush1.xpose.msra.mxu0 %v1420
        %1532 = vmatprep.subr.mxu0 0.0
        %1533 = vmatpush1.xpose.msra.mxu0 %v1417
        %1534 = vmatprep.subr.mxu0 0.0
        %1535 = vmatpush1.xpose.msra.mxu0 %v1414
        %1536 = vmatprep.subr.mxu0 0.0
        %1537 = vmatpush1.xpose.msra.mxu0 %v1411
        %1538 = vmatprep.subr.mxu0 0.0
        %1539 = vmatpush2.xpose.msra.mxu0 %v1504
        %1540 = vmatprep.subr.mxu0 0.0
        %1541 = vmatpush2.xpose.msra.mxu0 %v1501
        %1542 = vmatprep.subr.mxu0 0.0
        %1543 = vmatpush2.xpose.msra.mxu0 %v1498
        %1544 = vmatprep.subr.mxu0 0.0
        %1545 = vmatpush2.xpose.msra.mxu0 %v1495
        %1546 = vmatprep.subr.mxu0 0.0
        %1547 = vmatpush2.xpose.msra.mxu0 %v1492
        %1548 = vmatprep.subr.mxu0 0.0
        %1549 = vmatpush2.xpose.msra.mxu0 %v1489
        %1550 = vmatprep.subr.mxu0 0.0
        %1551 = vmatpush2.xpose.msra.mxu0 %v1486
        %1552 = vmatprep.subr.mxu0 0.0
        %1553 = vmatpush2.xpose.msra.mxu0 %v1483
        %1554 = vmatprep.subr.mxu0 0.0
        %1555 = vmatpush2.xpose.msra.mxu0 %v1480
        %1556 = vmatprep.subr.mxu0 0.0
        %1557 = vmatpush2.xpose.msra.mxu0 %v1477
        %1558 = vmatprep.subr.mxu0 0.0
        %1559 = vmatpush2.xpose.msra.mxu0 %v1474
        %1560 = vmatprep.subr.mxu0 0.0
        %1561 = vmatpush2.xpose.msra.mxu0 %v1471
        %1562 = vmatprep.subr.mxu0 0.0
        %1563 = vmatpush2.xpose.msra.mxu0 %v1468
        %1564 = vmatprep.subr.mxu0 0.0
        %1565 = vmatpush2.xpose.msra.mxu0 %v1465
        %1566 = vmatprep.subr.mxu0 0.0
        %1567 = vmatpush2.xpose.msra.mxu0 %v1462
        %1568 = vmatprep.subr.mxu0 0.0
        %1569 = vmatpush2.xpose.msra.mxu0 %v1459
        %1570 = vmatprep.mubr.f32.mxu0 0.0
        %1571 = vmatmul.mubr.f32.gmra.mxu0 %v1408
        %v1572 = vpop.f32.mrf.mxu0
        %v1573 = vadd.f32 %v1405, %v1572
        %v1574 = vpop.f32.mrf.mxu0
        %v1575 = vadd.f32 %v1405, %v1574
        %1576 = vdwg.mxu0
        %v1579 = vcombine.low %v1573, %v1575
        %v1581 = vunpack.c.l.s4 1983009808
        %v1582 = vunpack.c.0.s8 %v1581
        %v1583 = vlaneseq
        %v1584 = vshrl.u32 %v1583, 7
        %v1585 = vsub.s32 %v1582, %v1584
        %v1586 = vrot.slane %v1579, %v1585
        %1588 = vst [vmem:[%s358] sm:$0xf] %v1586
        %s1589 = sand.u32 %s235, 1
        %s1590 = scalar_lea.sflag [#allocation3], %s1589
        %s1591 = sand.u32 %s235, 1
        %s1592 = smul.addr %s1591, 4
        %s1593 = scalar_lea.vmem [#allocation2], %s1592
        // Predicated region
        $region57: #{tpu_custom_call.1} parent=55 // pred_check
          %p1594 = pneg %p245
        $region58: #{tpu_custom_call.1} parent=55 // pred_check_branch
          %1596 = sbr.rel (%p1594) target = $region60
        $region59: #{tpu_custom_call.1} parent=55 // pred_region
          %s1597 = smul.u32 2, %s23
          %s1599 = ssub.s32 64, 64
          %1600 = vsyncadd %s1590, %s1599
          %s1601 = smul.addr %s1597, 32
          %s1602 = scalar_lea.hbm %s9, %s1601
          %s1604 = sshll.u32 %s1593, 4
          %s1605 = int_to_ptr.vmem [resolvable:$true] %s1604
          %1607 = dma.vmem_to_hbm [thread:$0]  %s1605, 64, %s1602, %s1590
        $region60: #{tpu_custom_call.1} parent=55 // pred_fallthru
          _
      $region56: #{tpu_custom_call.1} parent=5 // pred_fallthru
        _
      %p1608 = scmp.le.s32.totalorder 2, %s18
      // Predicated region
      $region61: #{tpu_custom_call.1} parent=5 // pred_check
        %p1609 = pneg %p1608
      $region62: #{tpu_custom_call.1} parent=5 // pred_check_branch
        %1611 = sbr.rel (%p1609) target = $region64
      $region63: #{tpu_custom_call.1} parent=5 // pred_region
        %s1612 = ssub.s32 %s18, 2
        // Predicated region
        $region65: #{tpu_custom_call.1} parent=63 // pred_check
          %p1613 = pneg %p251
        $region66: #{tpu_custom_call.1} parent=63 // pred_check_branch
          %1615 = sbr.rel (%p1613) target = $region68
        $region67: #{tpu_custom_call.1} parent=63 // pred_region
          %s1616 = sand.u32 %s236, 1
          %s1617 = scalar_lea.sflag [#allocation3], %s1616
          %s1618 = sand.u32 %s236, 1
          %s1619 = smul.addr %s1618, 4
          %s1620 = scalar_lea.vmem [#allocation2], %s1619
          %1621 = dma.done %s1617, 64
        $region68: #{tpu_custom_call.1} parent=63 // pred_fallthru
          _
      $region64: #{tpu_custom_call.1} parent=5 // pred_fallthru
        _
    $region6: #{tpu_custom_call.1} parent=1 // loop_footer
      %s22 = sadd.s32 1, %s18
    $region7: #{tpu_custom_call.1} parent=1 // loop_footer_branch
      %17 = sbr.rel target = $region3
    $region8: #{tpu_custom_call.1} parent=1 // loop_exit
      _
    %1622 = vsyncpa [#allocation3], 1
    %s1623 = scalar_lea.sflag [#allocation3], 1
    %1624 = vsyncpa %s1623, 1

</llo_original>
